<compile_context>
chip_gen: v6e
topology: v6e:2x2x1
jax: 0.10.0
libtpu: 0.0.40
codegen_flags: <defaults>
</compile_context>

<pallas_src>
import jax
import jax.numpy as jnp
from jax.experimental import pallas as pl
from jax.experimental.pallas import tpu as pltpu


def _round_up(x, m):
    return ((x + m - 1) // m) * m


def _cdiv(a, b):
    return -(-a // b)


# ----------------------------------------------------------------------------
# Kernels
# ----------------------------------------------------------------------------
def afml_kernel_with_knowledge(
    emb_ref, ek_ref,
    w1m_ref, b1m_ref,
    w2blk_ref, b2m_ref,
    ki_w1a_ref, ki_w1b_ref, ki_b1_ref, ki_w2_ref, ki_b2x2_ref,
    cls_w_ref, cls_b_ref,
    repr_ref, logits_ref,
    *, fuse_aspect2,
):
    tile_b = emb_ref.shape[0]
    hs = w1m_ref.shape[1] // 2          # 128-aligned slot width (Hs)

    emb = emb_ref[...]                  # (tile_b, H) bf16
    ek = ek_ref[...]                    # (tile_b, H) bf16

    # Merged aspect layer-1: one (tile_b,H)@(H,2*Hs) MXU pass for both MLPs.
    h = jnp.maximum(
        jnp.dot(emb, w1m_ref[...], preferred_element_type=jnp.float32)
        + b1m_ref[...],
        0.0,
    ).astype(jnp.bfloat16)              # (tile_b, 2*Hs), pad lanes are 0

    if fuse_aspect2:
        # v6e/v7x: one K=N=2*Hs block-diagonal pass fills the 256-wide MXU.
        a2 = (
            jnp.dot(h, w2blk_ref[...], preferred_element_type=jnp.float32)
            + b2m_ref[...]
        )
        aspect_aware = a2[:, :hs]
        aspect_contrastive = a2[:, hs:]
    else:
        # v5x (128-wide MXU): two separate dots on the diagonal blocks.
        aspect_aware = (
            jnp.dot(h[:, :hs], w2blk_ref[:hs, :hs],
                    preferred_element_type=jnp.float32)
            + b2m_ref[:, :hs]
        )
        aspect_contrastive = (
            jnp.dot(h[:, hs:], w2blk_ref[hs:2 * hs, hs:2 * hs],
                    preferred_element_type=jnp.float32)
            + b2m_ref[:, hs:2 * hs]
        )

    # External-knowledge half of integrator layer-1: computed once, reused.
    ek_term = (
        jnp.dot(ek, ki_w1b_ref[...], preferred_element_type=jnp.float32)
        + ki_b1_ref[...]
    )                                   # (tile_b, Hs)

    # Batch-stack the two aspect streams -> one ki_w1a dot with M = 2*tile_b.
    z_in = jnp.concatenate(
        [aspect_aware, aspect_contrastive], axis=0).astype(jnp.bfloat16)
    ek2 = jnp.concatenate([ek_term, ek_term], axis=0)
    z = jnp.maximum(
        jnp.dot(z_in, ki_w1a_ref[...], preferred_element_type=jnp.float32)
        + ek2,
        0.0,
    )
    z_sum = z[:tile_b, :] + z[tile_b:, :]

    # ki_w2 is shared -> single second-layer matmul on the summed ReLU output.
    combined = (
        jnp.dot(z_sum.astype(jnp.bfloat16), ki_w2_ref[...],
                preferred_element_type=jnp.float32)
        + ki_b2x2_ref[...]
    )                                   # (tile_b, Hs), lane-dense
    repr_ref[...] = combined.astype(repr_ref.dtype)
    logits_ref[...] = (
        jnp.dot(combined.astype(jnp.bfloat16), cls_w_ref[...],
                preferred_element_type=jnp.float32)
        + cls_b_ref[...]
    ).astype(logits_ref.dtype)


def afml_kernel_no_knowledge(
    emb_ref,
    w1m_ref, b1m_ref,
    w2s_ref, b2s_ref,
    cls_w_ref, cls_b_ref,
    repr_ref, logits_ref,
):
    # Merged layer-1 (both aspect MLPs in one dot).
    h = jnp.maximum(
        jnp.dot(emb_ref[...], w1m_ref[...], preferred_element_type=jnp.float32)
        + b1m_ref[...],
        0.0,
    ).astype(jnp.bfloat16)
    # K-concatenated layer-2: one deep-K dot yields combined = aa + ac directly.
    combined = (
        jnp.dot(h, w2s_ref[...], preferred_element_type=jnp.float32)
        + b2s_ref[...]
    )
    repr_ref[...] = combined.astype(repr_ref.dtype)
    logits_ref[...] = (
        jnp.dot(combined.astype(jnp.bfloat16), cls_w_ref[...],
                preferred_element_type=jnp.float32)
        + cls_b_ref[...]
    ).astype(logits_ref.dtype)


# ----------------------------------------------------------------------------
# Parameter init (PyTorch-Linear-like uniform init, stored [in, out])
# ----------------------------------------------------------------------------
def init_params(key, hidden_dim, num_categories):
    def linear(k, fan_in, fan_out):
        k_w, k_b = jax.random.split(k)
        bound = 1.0 / jnp.sqrt(fan_in)
        w = jax.random.uniform(k_w, (fan_in, fan_out), jnp.float32, -bound, bound)
        b = jax.random.uniform(k_b, (1, fan_out), jnp.float32, -bound, bound)
        return w, b

    keys = jax.random.split(key, 7)
    H, C = hidden_dim, num_categories
    p = {}
    p["aa_w1"], p["aa_b1"] = linear(keys[0], H, H)
    p["aa_w2"], p["aa_b2"] = linear(keys[1], H, H)
    p["ac_w1"], p["ac_b1"] = linear(keys[2], H, H)
    p["ac_w2"], p["ac_b2"] = linear(keys[3], H, H)
    p["ki_w1"], p["ki_b1"] = linear(keys[4], 2 * H, H)   # concat([x, ek]) weight
    p["ki_w2"], p["ki_b2"] = linear(keys[5], H, H)
    p["cls_w"], p["cls_b"] = linear(keys[6], H, C)
    return p


# ----------------------------------------------------------------------------
# One-time kernel-side parameter prep: merges, bf16 casts, Hs/128 lane padding
# ----------------------------------------------------------------------------
def prepare_kernel_params(params):
    f32, bf16 = jnp.float32, jnp.bfloat16
    H = params["aa_w1"].shape[0]
    C = params["cls_w"].shape[1]
    Hs = _round_up(H, 128)      # 128-lane-aligned hidden width
    C_pad = _round_up(C, 128)   # lane-dense logits

    kp = {"H": H, "Hs": Hs, "C": C, "C_pad": C_pad}

    def pad_w(w, rows, cols):
        return jnp.zeros((rows, cols), f32).at[: w.shape[0], : w.shape[1]].set(w)

    # merged layer-1 weight [aa | ac], each half in its own 128-aligned slot
    w1m = jnp.zeros((H, 2 * Hs), f32)
    w1m = w1m.at[:, :H].set(params["aa_w1"]).at[:, Hs:Hs + H].set(params["ac_w1"])
    b1m = jnp.zeros((1, 2 * Hs), f32)
    b1m = b1m.at[:, :H].set(params["aa_b1"]).at[:, Hs:Hs + H].set(params["ac_b1"])
    kp["w1m"], kp["b1m"] = w1m.astype(bf16), b1m

    # aspect layer-2 as one block-diagonal weight (off-diagonal blocks = 0)
    w2blk = jnp.zeros((2 * Hs, 2 * Hs), f32)
    w2blk = (w2blk.at[:H, :H].set(params["aa_w2"])
                  .at[Hs:Hs + H, Hs:Hs + H].set(params["ac_w2"]))
    b2m = jnp.zeros((1, 2 * Hs), f32)
    b2m = b2m.at[:, :H].set(params["aa_b2"]).at[:, Hs:Hs + H].set(params["ac_b2"])
    kp["w2blk"], kp["b2m"] = w2blk.astype(bf16), b2m

    # no-knowledge path: K-concatenated layer-2 weight (rows match the h slots)
    w2s = jnp.zeros((2 * Hs, Hs), f32)
    w2s = w2s.at[:H, :H].set(params["aa_w2"]).at[Hs:Hs + H, :H].set(params["ac_w2"])
    b2s = jnp.zeros((1, Hs), f32).at[:, :H].set(params["aa_b2"] + params["ac_b2"])
    kp["w2s"], kp["b2s"] = w2s.astype(bf16), b2s

    # knowledge integrator: split concat weight, Hs-padded, biases pre-fused
    kp["ki_w1a"] = pad_w(params["ki_w1"][:H, :], Hs, Hs).astype(bf16)   # multiplies x
    kp["ki_w1b"] = pad_w(params["ki_w1"][H:, :], H, Hs).astype(bf16)    # multiplies ek
    kp["ki_b1"] = jnp.zeros((1, Hs), f32).at[:, :H].set(params["ki_b1"])
    kp["ki_w2"] = pad_w(params["ki_w2"], Hs, Hs).astype(bf16)
    kp["ki_b2x2"] = jnp.zeros((1, Hs), f32).at[:, :H].set(2.0 * params["ki_b2"])

    # classifier padded to 128-lane-dense output columns
    kp["cls_w"] = pad_w(params["cls_w"], Hs, C_pad).astype(bf16)
    kp["cls_b"] = jnp.zeros((1, C_pad), f32).at[:, :C].set(params["cls_b"])
    return kp


# ----------------------------------------------------------------------------
# Generation probing (best-effort; correctness never depends on it)
# ----------------------------------------------------------------------------
def _hw_info():
    vmem_cap = 64 * 1024 * 1024                 # conservative (v7x) fallback
    try:
        vmem_cap = int(pltpu.get_tpu_info().vmem_capacity_bytes)
    except Exception:
        pass
    kind = ""
    try:
        kind = jax.devices()[0].device_kind.lower()
    except Exception:
        pass
    narrow_mxu = any(t in kind for t in ("v2", "v3", "v4", "v5"))   # 128-wide MXU
    dual_tc = ("v7" in kind) or ("7x" in kind)                      # 2 TCs / chip
    return vmem_cap, (not narrow_mxu), dual_tc


# ----------------------------------------------------------------------------
# Wrapper
# ----------------------------------------------------------------------------
def aspect_focused_meta_learning(embeddings, kparams, external_knowledge=None,
                                 *, max_batch_tile=None, out_dtype=jnp.float32):
    B, H = embeddings.shape
    assert H == kparams["H"]
    Hs, C, C_pad = kparams["Hs"], kparams["C"], kparams["C_pad"]

    vmem_cap, wide_mxu, dual_tc = _hw_info()

    if external_knowledge is not None:
        weights = (
            kparams["w1m"], kparams["b1m"],
            kparams["w2blk"], kparams["b2m"],
            kparams["ki_w1a"], kparams["ki_w1b"], kparams["ki_b1"],
            kparams["ki_w2"], kparams["ki_b2x2"],
            kparams["cls_w"], kparams["cls_b"],
        )
        n_act = 2
    else:
        weights = (
            kparams["w1m"], kparams["b1m"],
            kparams["w2s"], kparams["b2s"],
            kparams["cls_w"], kparams["cls_b"],
        )
        n_act = 1
    weight_bytes = sum(int(w.size) * w.dtype.itemsize for w in weights)

    # ---- generation-aware batch tiling ----
    if max_batch_tile is None:
        # 512 on 128-MiB-VMEM chips (v5e/v6e), 256 on 64-MiB chips (v7x)
        max_batch_tile = 512 if vmem_cap >= 96 * 1024 * 1024 else 256

    # VMEM budget: single/double-buffered weights + 2x in/out tiles + temps
    vmem_limit = int(min(0.85 * vmem_cap, 112 * 1024 * 1024))
    vmem_limit = max(vmem_limit, 32 * 1024 * 1024)
    per_row = (2 * n_act * H * 2                 # bf16 input tiles, 2 buffers
               + 2 * (Hs + C_pad) * 4            # output tiles, 2 buffers
               + 16 * Hs * 4 + 4 * C_pad * 4)    # in-kernel f32 intermediates
    avail = vmem_limit - 2 * weight_bytes - 4 * 1024 * 1024
    if avail > 0:
        max_batch_tile = max(16, min(max_batch_tile, (avail // per_row) // 16 * 16))

    # pick tile_b to minimise batch padding; multiple of 16 (bf16 sublanes)
    num_tiles = _cdiv(B, max_batch_tile)
    if dual_tc and num_tiles == 1 and B >= 32:
        num_tiles = 2                            # keep both v7x TensorCores busy
    tile_b = _round_up(_cdiv(B, num_tiles), 16)
    B_pad = tile_b * num_tiles
    grid = (num_tiles,)

    def pad_batch(x):
        if B_pad != B:
            x = jnp.pad(x, ((0, B_pad - B), (0, 0)))
        return x.astype(jnp.bfloat16)

    emb = pad_batch(embeddings)
    act_spec = pl.BlockSpec((tile_b, H), lambda i: (i, 0))

    out_shape = (
        jax.ShapeDtypeStruct((B_pad, Hs), out_dtype),      # lane-dense repr
        jax.ShapeDtypeStruct((B_pad, C_pad), out_dtype),    # lane-dense logits
    )
    out_specs = (
        pl.BlockSpec((tile_b, Hs), lambda i: (i, 0)),
        pl.BlockSpec((tile_b, C_pad), lambda i: (i, 0)),
    )

    if external_knowledge is not None:
        ek = pad_batch(external_knowledge)
        args = (emb, ek) + weights
        fuse = wide_mxu

        def kernel(*refs):
            afml_kernel_with_knowledge(*refs, fuse_aspect2=fuse)

        a2_flops = (2 * Hs) * (2 * Hs) if fuse else 2 * Hs * Hs
        flops = 2 * B_pad * (H * 2 * Hs + a2_flops + H * Hs
                             + 2 * Hs * Hs + Hs * Hs + Hs * C_pad)
    else:
        args = (emb,) + weights
        kernel = afml_kernel_no_knowledge
        flops = 2 * B_pad * (H * 2 * Hs + 2 * Hs * Hs + Hs * C_pad)

    out_isz = jnp.dtype(out_dtype).itemsize
    bytes_accessed = (sum(int(a.size) * a.dtype.itemsize for a in args)
                      + B_pad * Hs * out_isz + B_pad * C_pad * out_isz)
    cost = pl.CostEstimate(flops=int(flops), transcendentals=0,
                           bytes_accessed=int(bytes_accessed))

    def build_in_specs(single_buffer_weights):
        if single_buffer_weights:
            # weights never change across batch tiles -> single-buffered VMEM
            def wspec(w):
                return pl.BlockSpec(w.shape, lambda i: (0, 0),
                                    pipeline_mode=pl.Buffered(1))
        else:
            def wspec(w):
                return pl.BlockSpec(w.shape, lambda i: (0, 0))
        return [act_spec] * n_act + [wspec(w) for w in weights]

    def run(single_buffer_weights):
        return pl.pallas_call(
            kernel,
            out_shape=out_shape,
            grid=grid,
            in_specs=build_in_specs(single_buffer_weights),
            out_specs=out_specs,
            compiler_params=pltpu.CompilerParams(
                dimension_semantics=("parallel",),   # batch tiles -> both TCs on v7x
                vmem_limit_bytes=vmem_limit,
            ),
            cost_estimate=cost,
        )(*args)

    try:
        repr_pad, logits_pad = run(True)
    except Exception:
        # Buffered(1) weight residency not supported by this jax build:
        # fall back to default double-buffering (identical results).
        repr_pad, logits_pad = run(False)

    return repr_pad[:B, :H], logits_pad[:B, :C]


# ----------------------------------------------------------------------------
# Pure-JAX reference (mirrors the PyTorch forward). mxu_dtype=bfloat16 mirrors
# the kernel's MXU precision policy (bf16 operands, f32 accumulation).
# ----------------------------------------------------------------------------
def reference(embeddings, params, external_knowledge=None, mxu_dtype=jnp.float32):
    def dot(x, w):
        return jnp.dot(x.astype(mxu_dtype), w.astype(mxu_dtype),
                       preferred_element_type=jnp.float32)

    def mlp2(x, w1, b1, w2, b2):
        h = jnp.maximum(dot(x, w1) + b1, 0.0)
        return dot(h, w2) + b2

    aa = mlp2(embeddings, params["aa_w1"], params["aa_b1"],
              params["aa_w2"], params["aa_b2"])
    ac = mlp2(embeddings, params["ac_w1"], params["ac_b1"],
              params["ac_w2"], params["ac_b2"])
    if external_knowledge is not None:
        def integrate(x):
            cat = jnp.concatenate([x, external_knowledge], axis=-1)
            return mlp2(cat, params["ki_w1"], params["ki_b1"],
                        params["ki_w2"], params["ki_b2"])
        aa = integrate(aa)
        ac = integrate(ac)
    combined = aa + ac
    logits = dot(combined, params["cls_w"]) + params["cls_b"]
    return combined, logits


if __name__ == "__main__":
    B, H, C = 8, 32, 4   # batch, hidden_size, len(aspect_categories)

    key = jax.random.PRNGKey(0)
    k_params, k_emb, k_ek = jax.random.split(key, 3)
    params = init_params(k_params, H, C)
    kparams = prepare_kernel_params(params)
    embeddings = jax.random.normal(k_emb, (B, H), jnp.float32)
    external_knowledge = jax.random.normal(k_ek, (B, H), jnp.float32)

    # ---- with external knowledge ----
    combined_repr, category_logits = aspect_focused_meta_learning(
        embeddings, kparams, external_knowledge
    )
    jax.block_until_ready((combined_repr, category_logits))
    assert combined_repr.shape == (B, H) and category_logits.shape == (B, C)

    ref_r_bf, ref_l_bf = reference(embeddings, params, external_knowledge,
                                   mxu_dtype=jnp.bfloat16)
    assert jnp.allclose(combined_repr, ref_r_bf, atol=2e-2, rtol=2e-2)
    assert jnp.allclose(category_logits, ref_l_bf, atol=2e-2, rtol=2e-2)
    # loose sanity vs full-f32 math (bf16 MXU rounding only)
    ref_r_f32, ref_l_f32 = reference(embeddings, params, external_knowledge)
    assert jnp.allclose(combined_repr, ref_r_f32, atol=2e-1, rtol=2e-1)
    assert jnp.allclose(category_logits, ref_l_f32, atol=2e-1, rtol=2e-1)

    # ---- without external knowledge ----
    r2, l2 = aspect_focused_meta_learning(embeddings, kparams, None)
    jax.block_until_ready((r2, l2))
    rr2_bf, rl2_bf = reference(embeddings, params, None, mxu_dtype=jnp.bfloat16)
    assert jnp.allclose(r2, rr2_bf, atol=2e-2, rtol=2e-2)
    assert jnp.allclose(l2, rl2_bf, atol=2e-2, rtol=2e-2)
    rr2_f32, rl2_f32 = reference(embeddings, params, None)
    assert jnp.allclose(r2, rr2_f32, atol=2e-1, rtol=2e-1)
    assert jnp.allclose(l2, rl2_f32, atol=2e-1, rtol=2e-1)

    print("KERNEL_OK")
</pallas_src>

<mosaic_0001>
module attributes {stable_mosaic.version = 11 : i64} {
  func.func @kernel(%arg0: i32, %arg1: memref<16x32xbf16, #tpu.memory_space<vmem>>, %arg2: memref<16x32xbf16, #tpu.memory_space<vmem>>, %arg3: memref<32x256xbf16, #tpu.memory_space<vmem>>, %arg4: memref<1x256xf32, #tpu.memory_space<vmem>>, %arg5: memref<256x256xbf16, #tpu.memory_space<vmem>>, %arg6: memref<1x256xf32, #tpu.memory_space<vmem>>, %arg7: memref<128x128xbf16, #tpu.memory_space<vmem>>, %arg8: memref<32x128xbf16, #tpu.memory_space<vmem>>, %arg9: memref<1x128xf32, #tpu.memory_space<vmem>>, %arg10: memref<128x128xbf16, #tpu.memory_space<vmem>>, %arg11: memref<1x128xf32, #tpu.memory_space<vmem>>, %arg12: memref<128x128xbf16, #tpu.memory_space<vmem>>, %arg13: memref<1x128xf32, #tpu.memory_space<vmem>>, %arg14: memref<16x128xf32, #tpu.memory_space<vmem>>, %arg15: memref<16x128xf32, #tpu.memory_space<vmem>>) attributes {dimension_semantics = [#tpu.dimension_semantics<parallel>], iteration_bounds = array<i64: 1>, scalar_prefetch = 0 : i64, scratch_operands = 0 : i64, tpu.core_type = #tpu.core_type<tc>, window_params = [{transform_indices = @transform_0, window_bounds = array<i64: 16, 32>}, {transform_indices = @transform_1, window_bounds = array<i64: 16, 32>}, {pipeline_mode = #tpu.pipeline_mode<synchronous>, transform_indices = @transform_2, window_bounds = array<i64: 32, 256>}, {pipeline_mode = #tpu.pipeline_mode<synchronous>, transform_indices = @transform_3, window_bounds = array<i64: 1, 256>}, {pipeline_mode = #tpu.pipeline_mode<synchronous>, transform_indices = @transform_4, window_bounds = array<i64: 256, 256>}, {pipeline_mode = #tpu.pipeline_mode<synchronous>, transform_indices = @transform_5, window_bounds = array<i64: 1, 256>}, {pipeline_mode = #tpu.pipeline_mode<synchronous>, transform_indices = @transform_6, window_bounds = array<i64: 128, 128>}, {pipeline_mode = #tpu.pipeline_mode<synchronous>, transform_indices = @transform_7, window_bounds = array<i64: 32, 128>}, {pipeline_mode = #tpu.pipeline_mode<synchronous>, transform_indices = @transform_8, window_bounds = array<i64: 1, 128>}, {pipeline_mode = #tpu.pipeline_mode<synchronous>, transform_indices = @transform_9, window_bounds = array<i64: 128, 128>}, {pipeline_mode = #tpu.pipeline_mode<synchronous>, transform_indices = @transform_10, window_bounds = array<i64: 1, 128>}, {pipeline_mode = #tpu.pipeline_mode<synchronous>, transform_indices = @transform_11, window_bounds = array<i64: 128, 128>}, {pipeline_mode = #tpu.pipeline_mode<synchronous>, transform_indices = @transform_12, window_bounds = array<i64: 1, 128>}, {transform_indices = @transform_13, window_bounds = array<i64: 16, 128>}, {transform_indices = @transform_14, window_bounds = array<i64: 16, 128>}]} {
    %c0 = arith.constant 0 : index
    %c0_0 = arith.constant 0 : index
    %0 = vector.load %arg1[%c0, %c0_0] : memref<16x32xbf16, #tpu.memory_space<vmem>>, vector<16x32xbf16>
    %c0_1 = arith.constant 0 : index
    %c0_2 = arith.constant 0 : index
    %1 = vector.load %arg2[%c0_1, %c0_2] : memref<16x32xbf16, #tpu.memory_space<vmem>>, vector<16x32xbf16>
    %c0_3 = arith.constant 0 : index
    %c0_4 = arith.constant 0 : index
    %2 = vector.load %arg3[%c0_3, %c0_4] : memref<32x256xbf16, #tpu.memory_space<vmem>>, vector<32x256xbf16>
    %cst = arith.constant dense<0.000000e+00> : vector<16x256xf32>
    %3 = tpu.matmul %0, %2, %cst {dimension_numbers = #tpu.dot_dimension_numbers<[1], [0], [0], [1], [0, 0, 1, 1], [], []>} : vector<16x32xbf16>, vector<32x256xbf16>, vector<16x256xf32> -> vector<16x256xf32>
    %c0_5 = arith.constant 0 : index
    %c0_6 = arith.constant 0 : index
    %4 = vector.load %arg4[%c0_5, %c0_6] : memref<1x256xf32, #tpu.memory_space<vmem>>, vector<1x256xf32>
    %5 = vector.broadcast %4 : vector<1x256xf32> to vector<16x256xf32>
    %6 = arith.addf %3, %5 : vector<16x256xf32>
    %cst_7 = arith.constant 0.000000e+00 : f32
    %7 = vector.broadcast %cst_7 : f32 to vector<16x256xf32>
    %8 = arith.maximumf %6, %7 : vector<16x256xf32>
    %9 = arith.truncf %8 : vector<16x256xf32> to vector<16x256xbf16>
    %c0_8 = arith.constant 0 : index
    %c0_9 = arith.constant 0 : index
    %10 = vector.load %arg5[%c0_8, %c0_9] : memref<256x256xbf16, #tpu.memory_space<vmem>>, vector<256x256xbf16>
    %cst_10 = arith.constant dense<0.000000e+00> : vector<16x256xf32>
    %11 = tpu.matmul %9, %10, %cst_10 {dimension_numbers = #tpu.dot_dimension_numbers<[1], [0], [0], [1], [0, 0, 1, 1], [], []>} : vector<16x256xbf16>, vector<256x256xbf16>, vector<16x256xf32> -> vector<16x256xf32>
    %c0_11 = arith.constant 0 : index
    %c0_12 = arith.constant 0 : index
    %12 = vector.load %arg6[%c0_11, %c0_12] : memref<1x256xf32, #tpu.memory_space<vmem>>, vector<1x256xf32>
    %13 = vector.broadcast %12 : vector<1x256xf32> to vector<16x256xf32>
    %14 = arith.addf %11, %13 : vector<16x256xf32>
    %15 = vector.extract_strided_slice %14 {offsets = [0, 0], sizes = [16, 128], strides = [1, 1]} : vector<16x256xf32> to vector<16x128xf32>
    %16 = vector.extract_strided_slice %14 {offsets = [0, 128], sizes = [16, 128], strides = [1, 1]} : vector<16x256xf32> to vector<16x128xf32>
    %c0_13 = arith.constant 0 : index
    %c0_14 = arith.constant 0 : index
    %17 = vector.load %arg8[%c0_13, %c0_14] : memref<32x128xbf16, #tpu.memory_space<vmem>>, vector<32x128xbf16>
    %cst_15 = arith.constant dense<0.000000e+00> : vector<16x128xf32>
    %18 = tpu.matmul %1, %17, %cst_15 {dimension_numbers = #tpu.dot_dimension_numbers<[1], [0], [0], [1], [0, 0, 1, 1], [], []>} : vector<16x32xbf16>, vector<32x128xbf16>, vector<16x128xf32> -> vector<16x128xf32>
    %c0_16 = arith.constant 0 : index
    %c0_17 = arith.constant 0 : index
    %19 = vector.load %arg9[%c0_16, %c0_17] : memref<1x128xf32, #tpu.memory_space<vmem>>, vector<1x128xf32>
    %20 = vector.broadcast %19 : vector<1x128xf32> to vector<16x128xf32>
    %21 = arith.addf %18, %20 : vector<16x128xf32>
    %22 = tpu.concatenate %15, %16 in 0 : vector<16x128xf32>, vector<16x128xf32> -> vector<32x128xf32>
    %23 = arith.truncf %22 : vector<32x128xf32> to vector<32x128xbf16>
    %24 = tpu.concatenate %21, %21 in 0 : vector<16x128xf32>, vector<16x128xf32> -> vector<32x128xf32>
    %c0_18 = arith.constant 0 : index
    %c0_19 = arith.constant 0 : index
    %25 = vector.load %arg7[%c0_18, %c0_19] : memref<128x128xbf16, #tpu.memory_space<vmem>>, vector<128x128xbf16>
    %cst_20 = arith.constant dense<0.000000e+00> : vector<32x128xf32>
    %26 = tpu.matmul %23, %25, %cst_20 {dimension_numbers = #tpu.dot_dimension_numbers<[1], [0], [0], [1], [0, 0, 1, 1], [], []>} : vector<32x128xbf16>, vector<128x128xbf16>, vector<32x128xf32> -> vector<32x128xf32>
    %27 = arith.addf %26, %24 : vector<32x128xf32>
    %cst_21 = arith.constant 0.000000e+00 : f32
    %28 = vector.broadcast %cst_21 : f32 to vector<32x128xf32>
    %29 = arith.maximumf %27, %28 : vector<32x128xf32>
    %30 = vector.extract_strided_slice %29 {offsets = [0, 0], sizes = [16, 128], strides = [1, 1]} : vector<32x128xf32> to vector<16x128xf32>
    %31 = vector.extract_strided_slice %29 {offsets = [16, 0], sizes = [16, 128], strides = [1, 1]} : vector<32x128xf32> to vector<16x128xf32>
    %32 = arith.addf %30, %31 : vector<16x128xf32>
    %33 = arith.truncf %32 : vector<16x128xf32> to vector<16x128xbf16>
    %c0_22 = arith.constant 0 : index
    %c0_23 = arith.constant 0 : index
    %34 = vector.load %arg10[%c0_22, %c0_23] : memref<128x128xbf16, #tpu.memory_space<vmem>>, vector<128x128xbf16>
    %cst_24 = arith.constant dense<0.000000e+00> : vector<16x128xf32>
    %35 = tpu.matmul %33, %34, %cst_24 {dimension_numbers = #tpu.dot_dimension_numbers<[1], [0], [0], [1], [0, 0, 1, 1], [], []>} : vector<16x128xbf16>, vector<128x128xbf16>, vector<16x128xf32> -> vector<16x128xf32>
    %c0_25 = arith.constant 0 : index
    %c0_26 = arith.constant 0 : index
    %36 = vector.load %arg11[%c0_25, %c0_26] : memref<1x128xf32, #tpu.memory_space<vmem>>, vector<1x128xf32>
    %37 = vector.broadcast %36 : vector<1x128xf32> to vector<16x128xf32>
    %38 = arith.addf %35, %37 : vector<16x128xf32>
    %c0_27 = arith.constant 0 : index
    %c0_28 = arith.constant 0 : index
    %39 = vector.load %arg14[%c0_27, %c0_28] : memref<16x128xf32, #tpu.memory_space<vmem>>, vector<16x128xf32>
    tpu.vector_store %arg14[%c0_27, %c0_28], %38 {strides = array<i32>} : memref<16x128xf32, #tpu.memory_space<vmem>>, vector<16x128xf32>,
    %40 = arith.truncf %38 : vector<16x128xf32> to vector<16x128xbf16>
    %c0_29 = arith.constant 0 : index
    %c0_30 = arith.constant 0 : index
    %41 = vector.load %arg12[%c0_29, %c0_30] : memref<128x128xbf16, #tpu.memory_space<vmem>>, vector<128x128xbf16>
    %cst_31 = arith.constant dense<0.000000e+00> : vector<16x128xf32>
    %42 = tpu.matmul %40, %41, %cst_31 {dimension_numbers = #tpu.dot_dimension_numbers<[1], [0], [0], [1], [0, 0, 1, 1], [], []>} : vector<16x128xbf16>, vector<128x128xbf16>, vector<16x128xf32> -> vector<16x128xf32>
    %c0_32 = arith.constant 0 : index
    %c0_33 = arith.constant 0 : index
    %43 = vector.load %arg13[%c0_32, %c0_33] : memref<1x128xf32, #tpu.memory_space<vmem>>, vector<1x128xf32>
    %44 = vector.broadcast %43 : vector<1x128xf32> to vector<16x128xf32>
    %45 = arith.addf %42, %44 : vector<16x128xf32>
    %c0_34 = arith.constant 0 : index
    %c0_35 = arith.constant 0 : index
    %46 = vector.load %arg15[%c0_34, %c0_35] : memref<16x128xf32, #tpu.memory_space<vmem>>, vector<16x128xf32>
    tpu.vector_store %arg15[%c0_34, %c0_35], %45 {strides = array<i32>} : memref<16x128xf32, #tpu.memory_space<vmem>>, vector<16x128xf32>,
    return
  }
  func.func @transform_0(%arg0: i32) -> (i32, i32) {
    %c0_i32 = arith.constant 0 : i32
    %c0_i32_0 = arith.constant 0 : i32
    return %arg0, %c0_i32 : i32, i32
  }
  func.func @transform_1(%arg0: i32) -> (i32, i32) {
    %c0_i32 = arith.constant 0 : i32
    %c0_i32_0 = arith.constant 0 : i32
    return %arg0, %c0_i32 : i32, i32
  }
  func.func @transform_2(%arg0: i32) -> (i32, i32) {
    %c0_i32 = arith.constant 0 : i32
    %c0_i32_0 = arith.constant 0 : i32
    %c0_i32_1 = arith.constant 0 : i32
    return %c0_i32, %c0_i32_0 : i32, i32
  }
  func.func @transform_3(%arg0: i32) -> (i32, i32) {
    %c0_i32 = arith.constant 0 : i32
    %c0_i32_0 = arith.constant 0 : i32
    %c0_i32_1 = arith.constant 0 : i32
    return %c0_i32, %c0_i32_0 : i32, i32
  }
  func.func @transform_4(%arg0: i32) -> (i32, i32) {
    %c0_i32 = arith.constant 0 : i32
    %c0_i32_0 = arith.constant 0 : i32
    %c0_i32_1 = arith.constant 0 : i32
    return %c0_i32, %c0_i32_0 : i32, i32
  }
  func.func @transform_5(%arg0: i32) -> (i32, i32) {
    %c0_i32 = arith.constant 0 : i32
    %c0_i32_0 = arith.constant 0 : i32
    %c0_i32_1 = arith.constant 0 : i32
    return %c0_i32, %c0_i32_0 : i32, i32
  }
  func.func @transform_6(%arg0: i32) -> (i32, i32) {
    %c0_i32 = arith.constant 0 : i32
    %c0_i32_0 = arith.constant 0 : i32
    %c0_i32_1 = arith.constant 0 : i32
    return %c0_i32, %c0_i32_0 : i32, i32
  }
  func.func @transform_7(%arg0: i32) -> (i32, i32) {
    %c0_i32 = arith.constant 0 : i32
    %c0_i32_0 = arith.constant 0 : i32
    %c0_i32_1 = arith.constant 0 : i32
    return %c0_i32, %c0_i32_0 : i32, i32
  }
  func.func @transform_8(%arg0: i32) -> (i32, i32) {
    %c0_i32 = arith.constant 0 : i32
    %c0_i32_0 = arith.constant 0 : i32
    %c0_i32_1 = arith.constant 0 : i32
    return %c0_i32, %c0_i32_0 : i32, i32
  }
  func.func @transform_9(%arg0: i32) -> (i32, i32) {
    %c0_i32 = arith.constant 0 : i32
    %c0_i32_0 = arith.constant 0 : i32
    %c0_i32_1 = arith.constant 0 : i32
    return %c0_i32, %c0_i32_0 : i32, i32
  }
  func.func @transform_10(%arg0: i32) -> (i32, i32) {
    %c0_i32 = arith.constant 0 : i32
    %c0_i32_0 = arith.constant 0 : i32
    %c0_i32_1 = arith.constant 0 : i32
    return %c0_i32, %c0_i32_0 : i32, i32
  }
  func.func @transform_11(%arg0: i32) -> (i32, i32) {
    %c0_i32 = arith.constant 0 : i32
    %c0_i32_0 = arith.constant 0 : i32
    %c0_i32_1 = arith.constant 0 : i32
    return %c0_i32, %c0_i32_0 : i32, i32
  }
  func.func @transform_12(%arg0: i32) -> (i32, i32) {
    %c0_i32 = arith.constant 0 : i32
    %c0_i32_0 = arith.constant 0 : i32
    %c0_i32_1 = arith.constant 0 : i32
    return %c0_i32, %c0_i32_0 : i32, i32
  }
  func.func @transform_13(%arg0: i32) -> (i32, i32) {
    %c0_i32 = arith.constant 0 : i32
    %c0_i32_0 = arith.constant 0 : i32
    return %arg0, %c0_i32 : i32, i32
  }
  func.func @transform_14(%arg0: i32) -> (i32, i32) {
    %c0_i32 = arith.constant 0 : i32
    %c0_i32_0 = arith.constant 0 : i32
    return %arg0, %c0_i32 : i32, i32
  }
}

module attributes {stable_mosaic.version = 11 : i64} {
  func.func @kernel(%arg0: i32, %arg1: memref<16x32xbf16, #tpu.memory_space<vmem>>, %arg2: memref<16x32xbf16, #tpu.memory_space<vmem>>, %arg3: memref<32x256xbf16, #tpu.memory_space<vmem>>, %arg4: memref<1x256xf32, #tpu.memory_space<vmem>>, %arg5: memref<256x256xbf16, #tpu.memory_space<vmem>>, %arg6: memref<1x256xf32, #tpu.memory_space<vmem>>, %arg7: memref<128x128xbf16, #tpu.memory_space<vmem>>, %arg8: memref<32x128xbf16, #tpu.memory_space<vmem>>, %arg9: memref<1x128xf32, #tpu.memory_space<vmem>>, %arg10: memref<128x128xbf16, #tpu.memory_space<vmem>>, %arg11: memref<1x128xf32, #tpu.memory_space<vmem>>, %arg12: memref<128x128xbf16, #tpu.memory_space<vmem>>, %arg13: memref<1x128xf32, #tpu.memory_space<vmem>>, %arg14: memref<16x128xf32, #tpu.memory_space<vmem>>, %arg15: memref<16x128xf32, #tpu.memory_space<vmem>>) attributes {dimension_semantics = [#tpu.dimension_semantics<parallel>], iteration_bounds = array<i64: 1>, scalar_prefetch = 0 : i64, scratch_operands = 0 : i64, tpu.core_type = #tpu.core_type<tc>, window_params = [{transform_indices = @transform_0, window_bounds = array<i64: 16, 32>}, {transform_indices = @transform_1, window_bounds = array<i64: 16, 32>}, {pipeline_mode = #tpu.pipeline_mode<synchronous>, transform_indices = @transform_2, window_bounds = array<i64: 32, 256>}, {pipeline_mode = #tpu.pipeline_mode<synchronous>, transform_indices = @transform_3, window_bounds = array<i64: 1, 256>}, {pipeline_mode = #tpu.pipeline_mode<synchronous>, transform_indices = @transform_4, window_bounds = array<i64: 256, 256>}, {pipeline_mode = #tpu.pipeline_mode<synchronous>, transform_indices = @transform_5, window_bounds = array<i64: 1, 256>}, {pipeline_mode = #tpu.pipeline_mode<synchronous>, transform_indices = @transform_6, window_bounds = array<i64: 128, 128>}, {pipeline_mode = #tpu.pipeline_mode<synchronous>, transform_indices = @transform_7, window_bounds = array<i64: 32, 128>}, {pipeline_mode = #tpu.pipeline_mode<synchronous>, transform_indices = @transform_8, window_bounds = array<i64: 1, 128>}, {pipeline_mode = #tpu.pipeline_mode<synchronous>, transform_indices = @transform_9, window_bounds = array<i64: 128, 128>}, {pipeline_mode = #tpu.pipeline_mode<synchronous>, transform_indices = @transform_10, window_bounds = array<i64: 1, 128>}, {pipeline_mode = #tpu.pipeline_mode<synchronous>, transform_indices = @transform_11, window_bounds = array<i64: 128, 128>}, {pipeline_mode = #tpu.pipeline_mode<synchronous>, transform_indices = @transform_12, window_bounds = array<i64: 1, 128>}, {transform_indices = @transform_13, window_bounds = array<i64: 16, 128>}, {transform_indices = @transform_14, window_bounds = array<i64: 16, 128>}]} {
    %c0 = arith.constant 0 : index
    %c0_0 = arith.constant 0 : index
    %0 = vector.load %arg1[%c0, %c0_0] : memref<16x32xbf16, #tpu.memory_space<vmem>>, vector<16x32xbf16>
    %c0_1 = arith.constant 0 : index
    %c0_2 = arith.constant 0 : index
    %1 = vector.load %arg2[%c0_1, %c0_2] : memref<16x32xbf16, #tpu.memory_space<vmem>>, vector<16x32xbf16>
    %c0_3 = arith.constant 0 : index
    %c0_4 = arith.constant 0 : index
    %2 = vector.load %arg3[%c0_3, %c0_4] : memref<32x256xbf16, #tpu.memory_space<vmem>>, vector<32x256xbf16>
    %cst = arith.constant dense<0.000000e+00> : vector<16x256xf32>
    %3 = tpu.matmul %0, %2, %cst {dimension_numbers = #tpu.dot_dimension_numbers<[1], [0], [0], [1], [0, 0, 1, 1], [], []>} : vector<16x32xbf16>, vector<32x256xbf16>, vector<16x256xf32> -> vector<16x256xf32>
    %c0_5 = arith.constant 0 : index
    %c0_6 = arith.constant 0 : index
    %4 = vector.load %arg4[%c0_5, %c0_6] : memref<1x256xf32, #tpu.memory_space<vmem>>, vector<1x256xf32>
    %5 = vector.broadcast %4 : vector<1x256xf32> to vector<16x256xf32>
    %6 = arith.addf %3, %5 : vector<16x256xf32>
    %cst_7 = arith.constant 0.000000e+00 : f32
    %7 = vector.broadcast %cst_7 : f32 to vector<16x256xf32>
    %8 = arith.maximumf %6, %7 : vector<16x256xf32>
    %9 = arith.truncf %8 : vector<16x256xf32> to vector<16x256xbf16>
    %c0_8 = arith.constant 0 : index
    %c0_9 = arith.constant 0 : index
    %10 = vector.load %arg5[%c0_8, %c0_9] : memref<256x256xbf16, #tpu.memory_space<vmem>>, vector<256x256xbf16>
    %cst_10 = arith.constant dense<0.000000e+00> : vector<16x256xf32>
    %11 = tpu.matmul %9, %10, %cst_10 {dimension_numbers = #tpu.dot_dimension_numbers<[1], [0], [0], [1], [0, 0, 1, 1], [], []>} : vector<16x256xbf16>, vector<256x256xbf16>, vector<16x256xf32> -> vector<16x256xf32>
    %c0_11 = arith.constant 0 : index
    %c0_12 = arith.constant 0 : index
    %12 = vector.load %arg6[%c0_11, %c0_12] : memref<1x256xf32, #tpu.memory_space<vmem>>, vector<1x256xf32>
    %13 = vector.broadcast %12 : vector<1x256xf32> to vector<16x256xf32>
    %14 = arith.addf %11, %13 : vector<16x256xf32>
    %15 = vector.extract_strided_slice %14 {offsets = [0, 0], sizes = [16, 128], strides = [1, 1]} : vector<16x256xf32> to vector<16x128xf32>
    %16 = vector.extract_strided_slice %14 {offsets = [0, 128], sizes = [16, 128], strides = [1, 1]} : vector<16x256xf32> to vector<16x128xf32>
    %c0_13 = arith.constant 0 : index
    %c0_14 = arith.constant 0 : index
    %17 = vector.load %arg8[%c0_13, %c0_14] : memref<32x128xbf16, #tpu.memory_space<vmem>>, vector<32x128xbf16>
    %cst_15 = arith.constant dense<0.000000e+00> : vector<16x128xf32>
    %18 = tpu.matmul %1, %17, %cst_15 {dimension_numbers = #tpu.dot_dimension_numbers<[1], [0], [0], [1], [0, 0, 1, 1], [], []>} : vector<16x32xbf16>, vector<32x128xbf16>, vector<16x128xf32> -> vector<16x128xf32>
    %c0_16 = arith.constant 0 : index
    %c0_17 = arith.constant 0 : index
    %19 = vector.load %arg9[%c0_16, %c0_17] : memref<1x128xf32, #tpu.memory_space<vmem>>, vector<1x128xf32>
    %20 = vector.broadcast %19 : vector<1x128xf32> to vector<16x128xf32>
    %21 = arith.addf %18, %20 : vector<16x128xf32>
    %22 = tpu.concatenate %15, %16 in 0 : vector<16x128xf32>, vector<16x128xf32> -> vector<32x128xf32>
    %23 = arith.truncf %22 : vector<32x128xf32> to vector<32x128xbf16>
    %24 = tpu.concatenate %21, %21 in 0 : vector<16x128xf32>, vector<16x128xf32> -> vector<32x128xf32>
    %c0_18 = arith.constant 0 : index
    %c0_19 = arith.constant 0 : index
    %25 = vector.load %arg7[%c0_18, %c0_19] : memref<128x128xbf16, #tpu.memory_space<vmem>>, vector<128x128xbf16>
    %cst_20 = arith.constant dense<0.000000e+00> : vector<32x128xf32>
    %26 = tpu.matmul %23, %25, %cst_20 {dimension_numbers = #tpu.dot_dimension_numbers<[1], [0], [0], [1], [0, 0, 1, 1], [], []>} : vector<32x128xbf16>, vector<128x128xbf16>, vector<32x128xf32> -> vector<32x128xf32>
    %27 = arith.addf %26, %24 : vector<32x128xf32>
    %cst_21 = arith.constant 0.000000e+00 : f32
    %28 = vector.broadcast %cst_21 : f32 to vector<32x128xf32>
    %29 = arith.maximumf %27, %28 : vector<32x128xf32>
    %30 = vector.extract_strided_slice %29 {offsets = [0, 0], sizes = [16, 128], strides = [1, 1]} : vector<32x128xf32> to vector<16x128xf32>
    %31 = vector.extract_strided_slice %29 {offsets = [16, 0], sizes = [16, 128], strides = [1, 1]} : vector<32x128xf32> to vector<16x128xf32>
    %32 = arith.addf %30, %31 : vector<16x128xf32>
    %33 = arith.truncf %32 : vector<16x128xf32> to vector<16x128xbf16>
    %c0_22 = arith.constant 0 : index
    %c0_23 = arith.constant 0 : index
    %34 = vector.load %arg10[%c0_22, %c0_23] : memref<128x128xbf16, #tpu.memory_space<vmem>>, vector<128x128xbf16>
    %cst_24 = arith.constant dense<0.000000e+00> : vector<16x128xf32>
    %35 = tpu.matmul %33, %34, %cst_24 {dimension_numbers = #tpu.dot_dimension_numbers<[1], [0], [0], [1], [0, 0, 1, 1], [], []>} : vector<16x128xbf16>, vector<128x128xbf16>, vector<16x128xf32> -> vector<16x128xf32>
    %c0_25 = arith.constant 0 : index
    %c0_26 = arith.constant 0 : index
    %36 = vector.load %arg11[%c0_25, %c0_26] : memref<1x128xf32, #tpu.memory_space<vmem>>, vector<1x128xf32>
    %37 = vector.broadcast %36 : vector<1x128xf32> to vector<16x128xf32>
    %38 = arith.addf %35, %37 : vector<16x128xf32>
    %c0_27 = arith.constant 0 : index
    %c0_28 = arith.constant 0 : index
    %39 = vector.load %arg14[%c0_27, %c0_28] : memref<16x128xf32, #tpu.memory_space<vmem>>, vector<16x128xf32>
    tpu.vector_store %arg14[%c0_27, %c0_28], %38 {strides = array<i32>} : memref<16x128xf32, #tpu.memory_space<vmem>>, vector<16x128xf32>,
    %40 = arith.truncf %38 : vector<16x128xf32> to vector<16x128xbf16>
    %c0_29 = arith.constant 0 : index
    %c0_30 = arith.constant 0 : index
    %41 = vector.load %arg12[%c0_29, %c0_30] : memref<128x128xbf16, #tpu.memory_space<vmem>>, vector<128x128xbf16>
    %cst_31 = arith.constant dense<0.000000e+00> : vector<16x128xf32>
    %42 = tpu.matmul %40, %41, %cst_31 {dimension_numbers = #tpu.dot_dimension_numbers<[1], [0], [0], [1], [0, 0, 1, 1], [], []>} : vector<16x128xbf16>, vector<128x128xbf16>, vector<16x128xf32> -> vector<16x128xf32>
    %c0_32 = arith.constant 0 : index
    %c0_33 = arith.constant 0 : index
    %43 = vector.load %arg13[%c0_32, %c0_33] : memref<1x128xf32, #tpu.memory_space<vmem>>, vector<1x128xf32>
    %44 = vector.broadcast %43 : vector<1x128xf32> to vector<16x128xf32>
    %45 = arith.addf %42, %44 : vector<16x128xf32>
    %c0_34 = arith.constant 0 : index
    %c0_35 = arith.constant 0 : index
    %46 = vector.load %arg15[%c0_34, %c0_35] : memref<16x128xf32, #tpu.memory_space<vmem>>, vector<16x128xf32>
    tpu.vector_store %arg15[%c0_34, %c0_35], %45 {strides = array<i32>} : memref<16x128xf32, #tpu.memory_space<vmem>>, vector<16x128xf32>,
    return
  }
  func.func @transform_0(%arg0: i32) -> (i32, i32) {
    %c0_i32 = arith.constant 0 : i32
    %c0_i32_0 = arith.constant 0 : i32
    return %arg0, %c0_i32 : i32, i32
  }
  func.func @transform_1(%arg0: i32) -> (i32, i32) {
    %c0_i32 = arith.constant 0 : i32
    %c0_i32_0 = arith.constant 0 : i32
    return %arg0, %c0_i32 : i32, i32
  }
  func.func @transform_2(%arg0: i32) -> (i32, i32) {
    %c0_i32 = arith.constant 0 : i32
    %c0_i32_0 = arith.constant 0 : i32
    %c0_i32_1 = arith.constant 0 : i32
    return %c0_i32, %c0_i32_0 : i32, i32
  }
  func.func @transform_3(%arg0: i32) -> (i32, i32) {
    %c0_i32 = arith.constant 0 : i32
    %c0_i32_0 = arith.constant 0 : i32
    %c0_i32_1 = arith.constant 0 : i32
    return %c0_i32, %c0_i32_0 : i32, i32
  }
  func.func @transform_4(%arg0: i32) -> (i32, i32) {
    %c0_i32 = arith.constant 0 : i32
    %c0_i32_0 = arith.constant 0 : i32
    %c0_i32_1 = arith.constant 0 : i32
    return %c0_i32, %c0_i32_0 : i32, i32
  }
  func.func @transform_5(%arg0: i32) -> (i32, i32) {
    %c0_i32 = arith.constant 0 : i32
    %c0_i32_0 = arith.constant 0 : i32
    %c0_i32_1 = arith.constant 0 : i32
    return %c0_i32, %c0_i32_0 : i32, i32
  }
  func.func @transform_6(%arg0: i32) -> (i32, i32) {
    %c0_i32 = arith.constant 0 : i32
    %c0_i32_0 = arith.constant 0 : i32
    %c0_i32_1 = arith.constant 0 : i32
    return %c0_i32, %c0_i32_0 : i32, i32
  }
  func.func @transform_7(%arg0: i32) -> (i32, i32) {
    %c0_i32 = arith.constant 0 : i32
    %c0_i32_0 = arith.constant 0 : i32
    %c0_i32_1 = arith.constant 0 : i32
    return %c0_i32, %c0_i32_0 : i32, i32
  }
  func.func @transform_8(%arg0: i32) -> (i32, i32) {
    %c0_i32 = arith.constant 0 : i32
    %c0_i32_0 = arith.constant 0 : i32
    %c0_i32_1 = arith.constant 0 : i32
    return %c0_i32, %c0_i32_0 : i32, i32
  }
  func.func @transform_9(%arg0: i32) -> (i32, i32) {
    %c0_i32 = arith.constant 0 : i32
    %c0_i32_0 = arith.constant 0 : i32
    %c0_i32_1 = arith.constant 0 : i32
    return %c0_i32, %c0_i32_0 : i32, i32
  }
  func.func @transform_10(%arg0: i32) -> (i32, i32) {
    %c0_i32 = arith.constant 0 : i32
    %c0_i32_0 = arith.constant 0 : i32
    %c0_i32_1 = arith.constant 0 : i32
    return %c0_i32, %c0_i32_0 : i32, i32
  }
  func.func @transform_11(%arg0: i32) -> (i32, i32) {
    %c0_i32 = arith.constant 0 : i32
    %c0_i32_0 = arith.constant 0 : i32
    %c0_i32_1 = arith.constant 0 : i32
    return %c0_i32, %c0_i32_0 : i32, i32
  }
  func.func @transform_12(%arg0: i32) -> (i32, i32) {
    %c0_i32 = arith.constant 0 : i32
    %c0_i32_0 = arith.constant 0 : i32
    %c0_i32_1 = arith.constant 0 : i32
    return %c0_i32, %c0_i32_0 : i32, i32
  }
  func.func @transform_13(%arg0: i32) -> (i32, i32) {
    %c0_i32 = arith.constant 0 : i32
    %c0_i32_0 = arith.constant 0 : i32
    return %arg0, %c0_i32 : i32, i32
  }
  func.func @transform_14(%arg0: i32) -> (i32, i32) {
    %c0_i32 = arith.constant 0 : i32
    %c0_i32_0 = arith.constant 0 : i32
    return %arg0, %c0_i32 : i32, i32
  }
}

</mosaic_0001>

<llo_original>
// kernel: tpu_custom_call.1
$region0: #{tpu_custom_call.1}
  #allocation0 [shape = 'u32[]', space=smem, size = 0x4, offset = 0x4, fixed_abs, tag = 'smem constant byte address 0x4 - core index']
  #allocation1 [shape = 'u32[144,128]{1,0:T(1,128)}', space=vmem, size = 0x12000, scoped, tag = 'internal scratch']
  %s0 = inlined_call_operand.hbm [shape: bf16[16,32], index: 0, kind: input, shape index: {}]
  %s1 = inlined_call_operand.hbm [shape: bf16[16,32], index: 1, kind: input, shape index: {}]
  %s2 = inlined_call_operand.hbm [shape: bf16[32,256], index: 2, kind: input, shape index: {}]
  %s3 = inlined_call_operand.vmem [shape: f32[1,256], index: 3, kind: input, shape index: {}]
  %s4 = inlined_call_operand.hbm [shape: bf16[256,256], index: 4, kind: input, shape index: {}]
  %s5 = inlined_call_operand.vmem [shape: f32[1,256], index: 5, kind: input, shape index: {}]
  %s6 = inlined_call_operand.hbm [shape: bf16[128,128], index: 6, kind: input, shape index: {}]
  %s7 = inlined_call_operand.hbm [shape: bf16[32,128], index: 7, kind: input, shape index: {}]
  %s8 = inlined_call_operand.vmem [shape: f32[1,128], index: 8, kind: input, shape index: {}]
  %s9 = inlined_call_operand.hbm [shape: bf16[128,128], index: 9, kind: input, shape index: {}]
  %s10 = inlined_call_operand.vmem [shape: f32[1,128], index: 10, kind: input, shape index: {}]
  %s11 = inlined_call_operand.hbm [shape: bf16[128,128], index: 11, kind: input, shape index: {}]
  %s12 = inlined_call_operand.vmem [shape: f32[1,128], index: 12, kind: input, shape index: {}]
  %s13 = inlined_call_operand.hbm [shape: f32[16,128], index: 13, kind: output, shape index: {0}]
  %s14 = inlined_call_operand.hbm [shape: f32[16,128], index: 14, kind: output, shape index: {1}]
  %15 = xla_tuple %s13, %s14
  %s16 = sld [smem:[#allocation0]]
  $region102: #{tpu_custom_call.1} parent=0
    _
  %s18 = ssub.s32 1, %s16
  %s19 = scalar_select 0, %s18, %s16
  $region1: #{tpu_custom_call.1} parent=0
    #allocation2 [shape = 'u8[4096]{0}', space=vmem, size = 0x1000, scoped, tag = 'input window, operand 0, single buffered']
    #allocation3 [shape = 's32[1]{0}', space=sflag, size = 0x4, scoped, tag = 'scoped memory for tpu_custom_call.1']
    #allocation4 [shape = 's32[1]{0}', space=sflag, size = 0x4, scoped, tag = 'scoped memory for tpu_custom_call.1']
    #allocation5 [shape = 'u8[4096]{0}', space=vmem, size = 0x1000, scoped, tag = 'input window, operand 1, single buffered']
    #allocation6 [shape = 's32[1]{0}', space=sflag, size = 0x4, scoped, tag = 'scoped memory for tpu_custom_call.1']
    #allocation7 [shape = 'u8[16384]{0}', space=vmem, size = 0x4000, scoped, tag = 'input window, operand 2, single buffered']
    #allocation8 [shape = 'u8[131072]{0}', space=vmem, size = 0x20000, scoped, tag = 'input window, operand 4, single buffered']
    #allocation9 [shape = 's32[1]{0}', space=sflag, size = 0x4, scoped, tag = 'scoped memory for tpu_custom_call.1']
    #allocation10 [shape = 'u8[32768]{0}', space=vmem, size = 0x8000, scoped, tag = 'input window, operand 6, single buffered']
    #allocation11 [shape = 'u8[8192]{0}', space=vmem, size = 0x2000, scoped, tag = 'input window, operand 7, single buffered']
    #allocation12 [shape = 's32[1]{0}', space=sflag, size = 0x4, scoped, tag = 'scoped memory for tpu_custom_call.1']
    #allocation13 [shape = 'u8[32768]{0}', space=vmem, size = 0x8000, scoped, tag = 'input window, operand 9, single buffered']
    #allocation14 [shape = 'u8[32768]{0}', space=vmem, size = 0x8000, scoped, tag = 'input window, operand 11, single buffered']
    #allocation15 [shape = 's32[1]{0}', space=sflag, size = 0x4, scoped, tag = 'scoped memory for tpu_custom_call.1']
    #allocation16 [shape = 'u8[8192]{0}', space=vmem, size = 0x2000, scoped, tag = 'output window, operand 0, single buffered']
    #allocation17 [shape = 'u8[8192]{0}', space=vmem, size = 0x2000, scoped, tag = 'output window, operand 1, single buffered']
    #allocation18 [shape = 's32[1]{0}', space=sflag, size = 0x4, scoped, tag = 'scoped memory for tpu_custom_call.1']
    %20 = vsyncpa [#allocation3], 0
    %21 = vsyncpa [#allocation6], 0
    %22 = vsyncpa [#allocation9], 0
    %23 = vsyncpa [#allocation12], 0
    %24 = vsyncpa [#allocation15], 0
    %25 = vsyncpa [#allocation4], 0
    %26 = vsyncpa [#allocation18], 0
    // Predicated region
    $region2: #{tpu_custom_call.1} parent=1 // pred_check
      _
    $region3: #{tpu_custom_call.1} parent=1 // pred_check_branch
      %28 = sbr.rel (0) target = $region5
    $region4: #{tpu_custom_call.1} parent=1 // pred_region
      %s30 = ssub.s32 128, 128
      %31 = vsyncadd [#allocation3], %s30
      %s32 = sshll.u32 [#allocation2], 4
      %s33 = int_to_ptr.vmem [resolvable:$true] %s32
      %38 = dma.hbm_to_vmem [thread:$0]  %s0, 128, %s33, [#allocation3], 64, 64, 4
    $region5: #{tpu_custom_call.1} parent=1 // pred_fallthru
      _
    // Predicated region
    $region6: #{tpu_custom_call.1} parent=1 // pred_check
      _
    $region7: #{tpu_custom_call.1} parent=1 // pred_check_branch
      %40 = sbr.rel (0) target = $region9
    $region8: #{tpu_custom_call.1} parent=1 // pred_region
      %s42 = ssub.s32 128, 128
      %43 = vsyncadd [#allocation6], %s42
      %s44 = sshll.u32 [#allocation5], 4
      %s45 = int_to_ptr.vmem [resolvable:$true] %s44
      %50 = dma.hbm_to_vmem [thread:$0]  %s1, 128, %s45, [#allocation6], 64, 64, 4
    $region9: #{tpu_custom_call.1} parent=1 // pred_fallthru
      _
    // Predicated region
    $region10: #{tpu_custom_call.1} parent=1 // pred_check
      _
    $region11: #{tpu_custom_call.1} parent=1 // pred_check_branch
      %52 = sbr.rel (0) target = $region13
    $region12: #{tpu_custom_call.1} parent=1 // pred_region
      %s54 = ssub.s32 512, 512
      %55 = vsyncadd [#allocation6], %s54
      %s56 = sshll.u32 [#allocation7], 4
      %s57 = int_to_ptr.vmem [resolvable:$true] %s56
      %62 = dma.hbm_to_vmem [thread:$0]  %s2, 512, %s57, [#allocation6], 128, 128, 8
    $region13: #{tpu_custom_call.1} parent=1 // pred_fallthru
      _
    // Predicated region
    $region14: #{tpu_custom_call.1} parent=1 // pred_check
      _
    $region15: #{tpu_custom_call.1} parent=1 // pred_check_branch
      %64 = sbr.rel (0) target = $region17
    $region16: #{tpu_custom_call.1} parent=1 // pred_region
      _
    $region17: #{tpu_custom_call.1} parent=1 // pred_fallthru
      _
    // Predicated region
    $region18: #{tpu_custom_call.1} parent=1 // pred_check
      _
    $region19: #{tpu_custom_call.1} parent=1 // pred_check_branch
      %66 = sbr.rel (0) target = $region21
    $region20: #{tpu_custom_call.1} parent=1 // pred_region
      %s68 = ssub.s32 4096, 4096
      %69 = vsyncadd [#allocation9], %s68
      %s70 = sshll.u32 [#allocation8], 4
      %s71 = int_to_ptr.vmem [resolvable:$true] %s70
      %76 = dma.hbm_to_vmem [thread:$0]  %s4, 4096, %s71, [#allocation9], 128, 128, 8
    $region21: #{tpu_custom_call.1} parent=1 // pred_fallthru
      _
    // Predicated region
    $region22: #{tpu_custom_call.1} parent=1 // pred_check
      _
    $region23: #{tpu_custom_call.1} parent=1 // pred_check_branch
      %78 = sbr.rel (0) target = $region25
    $region24: #{tpu_custom_call.1} parent=1 // pred_region
      _
    $region25: #{tpu_custom_call.1} parent=1 // pred_fallthru
      _
    // Predicated region
    $region26: #{tpu_custom_call.1} parent=1 // pred_check
      _
    $region27: #{tpu_custom_call.1} parent=1 // pred_check_branch
      %80 = sbr.rel (0) target = $region29
    $region28: #{tpu_custom_call.1} parent=1 // pred_region
      %s82 = ssub.s32 1024, 1024
      %83 = vsyncadd [#allocation9], %s82
      %s84 = sshll.u32 [#allocation10], 4
      %s85 = int_to_ptr.vmem [resolvable:$true] %s84
      %90 = dma.hbm_to_vmem [thread:$0]  %s6, 1024, %s85, [#allocation9], 64, 64, 4
    $region29: #{tpu_custom_call.1} parent=1 // pred_fallthru
      _
    // Predicated region
    $region30: #{tpu_custom_call.1} parent=1 // pred_check
      _
    $region31: #{tpu_custom_call.1} parent=1 // pred_check_branch
      %92 = sbr.rel (0) target = $region33
    $region32: #{tpu_custom_call.1} parent=1 // pred_region
      %s94 = ssub.s32 256, 256
      %95 = vsyncadd [#allocation12], %s94
      %s96 = sshll.u32 [#allocation11], 4
      %s97 = int_to_ptr.vmem [resolvable:$true] %s96
      %102 = dma.hbm_to_vmem [thread:$0]  %s7, 256, %s97, [#allocation12], 64, 64, 4
    $region33: #{tpu_custom_call.1} parent=1 // pred_fallthru
      _
    // Predicated region
    $region34: #{tpu_custom_call.1} parent=1 // pred_check
      _
    $region35: #{tpu_custom_call.1} parent=1 // pred_check_branch
      %104 = sbr.rel (0) target = $region37
    $region36: #{tpu_custom_call.1} parent=1 // pred_region
      _
    $region37: #{tpu_custom_call.1} parent=1 // pred_fallthru
      _
    // Predicated region
    $region38: #{tpu_custom_call.1} parent=1 // pred_check
      _
    $region39: #{tpu_custom_call.1} parent=1 // pred_check_branch
      %106 = sbr.rel (0) target = $region41
    $region40: #{tpu_custom_call.1} parent=1 // pred_region
      %s108 = ssub.s32 1024, 1024
      %109 = vsyncadd [#allocation12], %s108
      %s110 = sshll.u32 [#allocation13], 4
      %s111 = int_to_ptr.vmem [resolvable:$true] %s110
      %116 = dma.hbm_to_vmem [thread:$0]  %s9, 1024, %s111, [#allocation12], 64, 64, 4
    $region41: #{tpu_custom_call.1} parent=1 // pred_fallthru
      _
    // Predicated region
    $region42: #{tpu_custom_call.1} parent=1 // pred_check
      _
    $region43: #{tpu_custom_call.1} parent=1 // pred_check_branch
      %118 = sbr.rel (0) target = $region45
    $region44: #{tpu_custom_call.1} parent=1 // pred_region
      _
    $region45: #{tpu_custom_call.1} parent=1 // pred_fallthru
      _
    // Predicated region
    $region46: #{tpu_custom_call.1} parent=1 // pred_check
      _
    $region47: #{tpu_custom_call.1} parent=1 // pred_check_branch
      %120 = sbr.rel (0) target = $region49
    $region48: #{tpu_custom_call.1} parent=1 // pred_region
      %s122 = ssub.s32 1024, 1024
      %123 = vsyncadd [#allocation15], %s122
      %s124 = sshll.u32 [#allocation14], 4
      %s125 = int_to_ptr.vmem [resolvable:$true] %s124
      %130 = dma.hbm_to_vmem [thread:$0]  %s11, 1024, %s125, [#allocation15], 64, 64, 4
    $region49: #{tpu_custom_call.1} parent=1 // pred_fallthru
      _
    // Predicated region
    $region50: #{tpu_custom_call.1} parent=1 // pred_check
      _
    $region51: #{tpu_custom_call.1} parent=1 // pred_check_branch
      %132 = sbr.rel (0) target = $region53
    $region52: #{tpu_custom_call.1} parent=1 // pred_region
      _
    $region53: #{tpu_custom_call.1} parent=1 // pred_fallthru
      _
    // Predicated region
    $region54: #{tpu_custom_call.1} parent=1 // pred_check
      _
    $region55: #{tpu_custom_call.1} parent=1 // pred_check_branch
      %134 = sbr.rel (0) target = $region57
    $region56: #{tpu_custom_call.1} parent=1 // pred_region
      %135 = dma.done [#allocation3], 128
    $region57: #{tpu_custom_call.1} parent=1 // pred_fallthru
      _
    // Predicated region
    $region58: #{tpu_custom_call.1} parent=1 // pred_check
      _
    $region59: #{tpu_custom_call.1} parent=1 // pred_check_branch
      %137 = sbr.rel (0) target = $region61
    $region60: #{tpu_custom_call.1} parent=1 // pred_region
      %138 = dma.done [#allocation6], 128
    $region61: #{tpu_custom_call.1} parent=1 // pred_fallthru
      _
    // Predicated region
    $region62: #{tpu_custom_call.1} parent=1 // pred_check
      _
    $region63: #{tpu_custom_call.1} parent=1 // pred_check_branch
      %140 = sbr.rel (0) target = $region65
    $region64: #{tpu_custom_call.1} parent=1 // pred_region
      %141 = dma.done [#allocation6], 512
    $region65: #{tpu_custom_call.1} parent=1 // pred_fallthru
      _
    // Predicated region
    $region66: #{tpu_custom_call.1} parent=1 // pred_check
      _
    $region67: #{tpu_custom_call.1} parent=1 // pred_check_branch
      %143 = sbr.rel (0) target = $region69
    $region68: #{tpu_custom_call.1} parent=1 // pred_region
      %144 = dma.done [#allocation9], 4096
    $region69: #{tpu_custom_call.1} parent=1 // pred_fallthru
      _
    // Predicated region
    $region70: #{tpu_custom_call.1} parent=1 // pred_check
      _
    $region71: #{tpu_custom_call.1} parent=1 // pred_check_branch
      %146 = sbr.rel (0) target = $region73
    $region72: #{tpu_custom_call.1} parent=1 // pred_region
      %147 = dma.done [#allocation9], 1024
    $region73: #{tpu_custom_call.1} parent=1 // pred_fallthru
      _
    // Predicated region
    $region74: #{tpu_custom_call.1} parent=1 // pred_check
      _
    $region75: #{tpu_custom_call.1} parent=1 // pred_check_branch
      %149 = sbr.rel (0) target = $region77
    $region76: #{tpu_custom_call.1} parent=1 // pred_region
      %150 = dma.done [#allocation12], 256
    $region77: #{tpu_custom_call.1} parent=1 // pred_fallthru
      _
    // Predicated region
    $region78: #{tpu_custom_call.1} parent=1 // pred_check
      _
    $region79: #{tpu_custom_call.1} parent=1 // pred_check_branch
      %152 = sbr.rel (0) target = $region81
    $region80: #{tpu_custom_call.1} parent=1 // pred_region
      %153 = dma.done [#allocation12], 1024
    $region81: #{tpu_custom_call.1} parent=1 // pred_fallthru
      _
    // Predicated region
    $region82: #{tpu_custom_call.1} parent=1 // pred_check
      _
    $region83: #{tpu_custom_call.1} parent=1 // pred_check_branch
      %155 = sbr.rel (0) target = $region85
    $region84: #{tpu_custom_call.1} parent=1 // pred_region
      %156 = dma.done [#allocation15], 1024
    $region85: #{tpu_custom_call.1} parent=1 // pred_fallthru
      _
    %v158 = vld [vmem:[#allocation2] sm:$0xf]
    %v159 = vld [vmem:[#allocation2 + $0x4] sm:$0xf]
    %v160 = vld [vmem:[#allocation5] sm:$0xf]
    %v161 = vld [vmem:[#allocation5 + $0x4] sm:$0xf]
    %v162 = vld [vmem:[#allocation7] sm:$0xff]
    %v163 = vld [vmem:[#allocation7 + $0x8] sm:$0xff]
    %v164 = vld [vmem:[#allocation7 + $0x10] sm:$0xff]
    %v165 = vld [vmem:[#allocation7 + $0x18] sm:$0xff]
    %v166 = vld [vmem:[%s3] sm:$0x3]
    %v168 = vlaneseq
    %v169 = vshrl.u32 %v168, 7
    %v170 = vsub.s32 0, %v169
    %v171 = vrot.slane %v166, %v170
    %v172 = vlaneseq
    %v173 = vshrl.u32 %v172, 7
    %v174 = vsub.s32 1, %v173
    %v175 = vrot.slane %v166, %v174
    %v180 = vunpack.c.l.b16 %v158
    %v181 = vunpack.c.l.b16 %v159
    %v182 = vpack.c.b16 %v181, %v180
    %v187 = vunpack.c.l.b16 %v162
    %v188 = vunpack.c.h.b16 %v162
    %v189 = vunpack.c.l.b16 %v163
    %v190 = vunpack.c.h.b16 %v163
    %v191 = vunpack.c.l.b16 %v164
    %v192 = vunpack.c.h.b16 %v164
    %v193 = vunpack.c.l.b16 %v165
    %v194 = vunpack.c.h.b16 %v165
    %v195 = vpack.c.b16 %v189, %v187
    %v196 = vpack.c.b16 %v190, %v188
    %v197 = vpack.c.b16 %v193, %v191
    %v198 = vpack.c.b16 %v194, %v192
    %vm203 = vcmask 261120
    %v205 = vsel %vm203, %v182, 0
    %207 = vmatprep.subr.bf16.mxu0 0
    %208 = vmatpush1.bf16.msra.mxu0 0
    %209 = vmatprep.subr.bf16.mxu0 0
    %210 = vmatpush1.bf16.msra.mxu0 0
    %211 = vmatprep.subr.bf16.mxu0 0
    %212 = vmatpush1.bf16.msra.mxu0 0
    %213 = vmatprep.subr.bf16.mxu0 0
    %214 = vmatpush1.bf16.msra.mxu0 0
    %215 = vmatprep.subr.bf16.mxu0 0
    %216 = vmatpush1.bf16.msra.mxu0 0
    %217 = vmatprep.subr.bf16.mxu0 0
    %218 = vmatpush1.bf16.msra.mxu0 0
    %219 = vmatprep.subr.bf16.mxu0 %v198
    %220 = vmatpush1.bf16.msra.mxu0 %v197
    %221 = vmatprep.subr.bf16.mxu0 %v196
    %222 = vmatpush1.bf16.msra.mxu0 %v195
    %223 = vmatprep.subr.bf16.mxu0 0
    %224 = vmatpush2.bf16.msra.mxu0 0
    %225 = vmatprep.subr.bf16.mxu0 0
    %226 = vmatpush2.bf16.msra.mxu0 0
    %227 = vmatprep.subr.bf16.mxu0 0
    %228 = vmatpush2.bf16.msra.mxu0 0
    %229 = vmatprep.subr.bf16.mxu0 0
    %230 = vmatpush2.bf16.msra.mxu0 0
    %231 = vmatprep.subr.bf16.mxu0 0
    %232 = vmatpush2.bf16.msra.mxu0 0
    %233 = vmatprep.subr.bf16.mxu0 0
    %234 = vmatpush2.bf16.msra.mxu0 0
    %235 = vmatprep.subr.bf16.mxu0 0
    %236 = vmatpush2.bf16.msra.mxu0 0
    %237 = vmatprep.subr.bf16.mxu0 0
    %238 = vmatpush2.bf16.msra.mxu0 0
    %239 = vmatprep.mubr.bf16.mxu0 0
    %240 = vmatmul.mubr.bf16.gmra.mxu0 %v205
    %v241 = vpop.f32.mrf.mxu0
    %v242 = vadd.f32 %v171, %v241
    %v243 = vpop.f32.mrf.mxu0
    %v244 = vadd.f32 %v175, %v243
    %v245 = vpop.f32.mrf.mxu0
    %v246 = vadd.f32 %v171, %v245
    %v247 = vpop.f32.mrf.mxu0
    %v248 = vadd.f32 %v175, %v247
    %249 = vdwg.mxu0
    %v250 = vmax.f32 %v242, 0.0
    %v251 = vmax.f32 %v244, 0.0
    %v252 = vmax.f32 %v246, 0.0
    %v253 = vmax.f32 %v248, 0.0
    %v254 = vpack.c.bf16 %v252, %v250
    %v255 = vpack.c.bf16 %v253, %v251
    %v256 = vld [vmem:[#allocation8] sm:$0xff]
    %v257 = vld [vmem:[#allocation8 + $0x8] sm:$0xff]
    %v258 = vld [vmem:[#allocation8 + $0x10] sm:$0xff]
    %v259 = vld [vmem:[#allocation8 + $0x18] sm:$0xff]
    %v260 = vld [vmem:[#allocation8 + $0x20] sm:$0xff]
    %v261 = vld [vmem:[#allocation8 + $0x28] sm:$0xff]
    %v262 = vld [vmem:[#allocation8 + $0x30] sm:$0xff]
    %v263 = vld [vmem:[#allocation8 + $0x38] sm:$0xff]
    %v264 = vld [vmem:[#allocation8 + $0x40] sm:$0xff]
    %v265 = vld [vmem:[#allocation8 + $0x48] sm:$0xff]
    %v266 = vld [vmem:[#allocation8 + $0x50] sm:$0xff]
    %v267 = vld [vmem:[#allocation8 + $0x58] sm:$0xff]
    %v268 = vld [vmem:[#allocation8 + $0x60] sm:$0xff]
    %v269 = vld [vmem:[#allocation8 + $0x68] sm:$0xff]
    %v270 = vld [vmem:[#allocation8 + $0x70] sm:$0xff]
    %v271 = vld [vmem:[#allocation8 + $0x78] sm:$0xff]
    %v272 = vld [vmem:[#allocation8 + $0x80] sm:$0xff]
    %v273 = vld [vmem:[#allocation8 + $0x88] sm:$0xff]
    %v274 = vld [vmem:[#allocation8 + $0x90] sm:$0xff]
    %v275 = vld [vmem:[#allocation8 + $0x98] sm:$0xff]
    %v276 = vld [vmem:[#allocation8 + $0xa0] sm:$0xff]
    %v277 = vld [vmem:[#allocation8 + $0xa8] sm:$0xff]
    %v278 = vld [vmem:[#allocation8 + $0xb0] sm:$0xff]
    %v279 = vld [vmem:[#allocation8 + $0xb8] sm:$0xff]
    %v280 = vld [vmem:[#allocation8 + $0xc0] sm:$0xff]
    %v281 = vld [vmem:[#allocation8 + $0xc8] sm:$0xff]
    %v282 = vld [vmem:[#allocation8 + $0xd0] sm:$0xff]
    %v283 = vld [vmem:[#allocation8 + $0xd8] sm:$0xff]
    %v284 = vld [vmem:[#allocation8 + $0xe0] sm:$0xff]
    %v285 = vld [vmem:[#allocation8 + $0xe8] sm:$0xff]
    %v286 = vld [vmem:[#allocation8 + $0xf0] sm:$0xff]
    %v287 = vld [vmem:[#allocation8 + $0xf8] sm:$0xff]
    %v288 = vld [vmem:[%s5] sm:$0x3]
    %v290 = vlaneseq
    %v291 = vshrl.u32 %v290, 7
    %v292 = vsub.s32 0, %v291
    %v293 = vrot.slane %v288, %v292
    %v294 = vlaneseq
    %v295 = vshrl.u32 %v294, 7
    %v296 = vsub.s32 1, %v295
    %v297 = vrot.slane %v288, %v296
    %v332 = vunpack.c.l.b16 %v256
    %v333 = vunpack.c.h.b16 %v256
    %v334 = vunpack.c.l.b16 %v257
    %v335 = vunpack.c.h.b16 %v257
    %v336 = vunpack.c.l.b16 %v258
    %v337 = vunpack.c.h.b16 %v258
    %v338 = vunpack.c.l.b16 %v259
    %v339 = vunpack.c.h.b16 %v259
    %v340 = vunpack.c.l.b16 %v260
    %v341 = vunpack.c.h.b16 %v260
    %v342 = vunpack.c.l.b16 %v261
    %v343 = vunpack.c.h.b16 %v261
    %v344 = vunpack.c.l.b16 %v262
    %v345 = vunpack.c.h.b16 %v262
    %v346 = vunpack.c.l.b16 %v263
    %v347 = vunpack.c.h.b16 %v263
    %v348 = vunpack.c.l.b16 %v264
    %v349 = vunpack.c.h.b16 %v264
    %v350 = vunpack.c.l.b16 %v265
    %v351 = vunpack.c.h.b16 %v265
    %v352 = vunpack.c.l.b16 %v266
    %v353 = vunpack.c.h.b16 %v266
    %v354 = vunpack.c.l.b16 %v267
    %v355 = vunpack.c.h.b16 %v267
    %v356 = vunpack.c.l.b16 %v268
    %v357 = vunpack.c.h.b16 %v268
    %v358 = vunpack.c.l.b16 %v269
    %v359 = vunpack.c.h.b16 %v269
    %v360 = vunpack.c.l.b16 %v270
    %v361 = vunpack.c.h.b16 %v270
    %v362 = vunpack.c.l.b16 %v271
    %v363 = vunpack.c.h.b16 %v271
    %v364 = vunpack.c.l.b16 %v272
    %v365 = vunpack.c.h.b16 %v272
    %v366 = vunpack.c.l.b16 %v273
    %v367 = vunpack.c.h.b16 %v273
    %v368 = vunpack.c.l.b16 %v274
    %v369 = vunpack.c.h.b16 %v274
    %v370 = vunpack.c.l.b16 %v275
    %v371 = vunpack.c.h.b16 %v275
    %v372 = vunpack.c.l.b16 %v276
    %v373 = vunpack.c.h.b16 %v276
    %v374 = vunpack.c.l.b16 %v277
    %v375 = vunpack.c.h.b16 %v277
    %v376 = vunpack.c.l.b16 %v278
    %v377 = vunpack.c.h.b16 %v278
    %v378 = vunpack.c.l.b16 %v279
    %v379 = vunpack.c.h.b16 %v279
    %v380 = vunpack.c.l.b16 %v280
    %v381 = vunpack.c.h.b16 %v280
    %v382 = vunpack.c.l.b16 %v281
    %v383 = vunpack.c.h.b16 %v281
    %v384 = vunpack.c.l.b16 %v282
    %v385 = vunpack.c.h.b16 %v282
    %v386 = vunpack.c.l.b16 %v283
    %v387 = vunpack.c.h.b16 %v283
    %v388 = vunpack.c.l.b16 %v284
    %v389 = vunpack.c.h.b16 %v284
    %v390 = vunpack.c.l.b16 %v285
    %v391 = vunpack.c.h.b16 %v285
    %v392 = vunpack.c.l.b16 %v286
    %v393 = vunpack.c.h.b16 %v286
    %v394 = vunpack.c.l.b16 %v287
    %v395 = vunpack.c.h.b16 %v287
    %v396 = vpack.c.b16 %v334, %v332
    %v397 = vpack.c.b16 %v335, %v333
    %v398 = vpack.c.b16 %v338, %v336
    %v399 = vpack.c.b16 %v339, %v337
    %v400 = vpack.c.b16 %v342, %v340
    %v401 = vpack.c.b16 %v343, %v341
    %v402 = vpack.c.b16 %v346, %v344
    %v403 = vpack.c.b16 %v347, %v345
    %v404 = vpack.c.b16 %v350, %v348
    %v405 = vpack.c.b16 %v351, %v349
    %v406 = vpack.c.b16 %v354, %v352
    %v407 = vpack.c.b16 %v355, %v353
    %v408 = vpack.c.b16 %v358, %v356
    %v409 = vpack.c.b16 %v359, %v357
    %v410 = vpack.c.b16 %v362, %v360
    %v411 = vpack.c.b16 %v363, %v361
    %v412 = vpack.c.b16 %v366, %v364
    %v413 = vpack.c.b16 %v367, %v365
    %v414 = vpack.c.b16 %v370, %v368
    %v415 = vpack.c.b16 %v371, %v369
    %v416 = vpack.c.b16 %v374, %v372
    %v417 = vpack.c.b16 %v375, %v373
    %v418 = vpack.c.b16 %v378, %v376
    %v419 = vpack.c.b16 %v379, %v377
    %v420 = vpack.c.b16 %v382, %v380
    %v421 = vpack.c.b16 %v383, %v381
    %v422 = vpack.c.b16 %v386, %v384
    %v423 = vpack.c.b16 %v387, %v385
    %v424 = vpack.c.b16 %v390, %v388
    %v425 = vpack.c.b16 %v391, %v389
    %v426 = vpack.c.b16 %v394, %v392
    %v427 = vpack.c.b16 %v395, %v393
    %460 = vmatprep.subr.bf16.mxu0 %v411
    %461 = vmatpush1.bf16.msra.mxu0 %v410
    %462 = vmatprep.subr.bf16.mxu0 %v409
    %463 = vmatpush1.bf16.msra.mxu0 %v408
    %464 = vmatprep.subr.bf16.mxu0 %v407
    %465 = vmatpush1.bf16.msra.mxu0 %v406
    %466 = vmatprep.subr.bf16.mxu0 %v405
    %467 = vmatpush1.bf16.msra.mxu0 %v404
    %468 = vmatprep.subr.bf16.mxu0 %v403
    %469 = vmatpush1.bf16.msra.mxu0 %v402
    %470 = vmatprep.subr.bf16.mxu0 %v401
    %471 = vmatpush1.bf16.msra.mxu0 %v400
    %472 = vmatprep.subr.bf16.mxu0 %v399
    %473 = vmatpush1.bf16.msra.mxu0 %v398
    %474 = vmatprep.subr.bf16.mxu0 %v397
    %475 = vmatpush1.bf16.msra.mxu0 %v396
    %476 = vmatprep.subr.bf16.mxu0 %v427
    %477 = vmatpush2.bf16.msra.mxu0 %v426
    %478 = vmatprep.subr.bf16.mxu0 %v425
    %479 = vmatpush2.bf16.msra.mxu0 %v424
    %480 = vmatprep.subr.bf16.mxu0 %v423
    %481 = vmatpush2.bf16.msra.mxu0 %v422
    %482 = vmatprep.subr.bf16.mxu0 %v421
    %483 = vmatpush2.bf16.msra.mxu0 %v420
    %484 = vmatprep.subr.bf16.mxu0 %v419
    %485 = vmatpush2.bf16.msra.mxu0 %v418
    %486 = vmatprep.subr.bf16.mxu0 %v417
    %487 = vmatpush2.bf16.msra.mxu0 %v416
    %488 = vmatprep.subr.bf16.mxu0 %v415
    %489 = vmatpush2.bf16.msra.mxu0 %v414
    %490 = vmatprep.subr.bf16.mxu0 %v413
    %491 = vmatpush2.bf16.msra.mxu0 %v412
    %492 = vmatprep.mubr.bf16.mxu0 %v255
    %493 = vmatmul.mubr.bf16.gmra.mxu0 %v254
    %v494 = vpop.f32.mrf.mxu0
    %v495 = vadd.f32 %v293, %v494
    %v496 = vpop.f32.mrf.mxu0
    %v497 = vadd.f32 %v297, %v496
    %v498 = vpop.f32.mrf.mxu0
    %v499 = vadd.f32 %v293, %v498
    %v500 = vpop.f32.mrf.mxu0
    %v501 = vadd.f32 %v297, %v500
    %502 = vdwg.mxu0
    %v503 = vld [vmem:[#allocation11] sm:$0xf]
    %v504 = vld [vmem:[#allocation11 + $0x4] sm:$0xf]
    %v505 = vld [vmem:[#allocation11 + $0x8] sm:$0xf]
    %v506 = vld [vmem:[#allocation11 + $0xc] sm:$0xf]
    %v507 = vld [vmem:[%s8] sm:$0x1]
    %v509 = vlaneseq
    %v510 = vshrl.u32 %v509, 7
    %v511 = vsub.s32 0, %v510
    %v512 = vrot.slane %v507, %v511
    %v516 = vunpack.c.l.b16 %v160
    %v517 = vunpack.c.l.b16 %v161
    %v518 = vpack.c.b16 %v517, %v516
    %v523 = vunpack.c.l.b16 %v503
    %v524 = vunpack.c.l.b16 %v504
    %v525 = vunpack.c.l.b16 %v505
    %v526 = vunpack.c.l.b16 %v506
    %v527 = vpack.c.b16 %v524, %v523
    %v528 = vpack.c.b16 %v526, %v525
    %v532 = vsel %vm203, %v518, 0
    %534 = vmatprep.subr.bf16.mxu0 0
    %535 = vmatpush1.bf16.msra.mxu0 0
    %536 = vmatprep.subr.bf16.mxu0 0
    %537 = vmatpush1.bf16.msra.mxu0 0
    %538 = vmatprep.subr.bf16.mxu0 0
    %539 = vmatpush1.bf16.msra.mxu0 0
    %540 = vmatprep.subr.bf16.mxu0 0
    %541 = vmatpush1.bf16.msra.mxu0 0
    %542 = vmatprep.subr.bf16.mxu0 0
    %543 = vmatpush1.bf16.msra.mxu0 0
    %544 = vmatprep.subr.bf16.mxu0 0
    %545 = vmatpush1.bf16.msra.mxu0 0
    %546 = vmatprep.subr.bf16.mxu0 0
    %547 = vmatpush1.bf16.msra.mxu0 %v528
    %548 = vmatprep.subr.bf16.mxu0 0
    %549 = vmatpush1.bf16.msra.mxu0 %v527
    %550 = vmatprep.subr.bf16.mxu0 0
    %551 = vmatpush2.bf16.msra.mxu0 0
    %552 = vmatprep.subr.bf16.mxu0 0
    %553 = vmatpush2.bf16.msra.mxu0 0
    %554 = vmatprep.subr.bf16.mxu0 0
    %555 = vmatpush2.bf16.msra.mxu0 0
    %556 = vmatprep.subr.bf16.mxu0 0
    %557 = vmatpush2.bf16.msra.mxu0 0
    %558 = vmatprep.subr.bf16.mxu0 0
    %559 = vmatpush2.bf16.msra.mxu0 0
    %560 = vmatprep.subr.bf16.mxu0 0
    %561 = vmatpush2.bf16.msra.mxu0 0
    %562 = vmatprep.subr.bf16.mxu0 0
    %563 = vmatpush2.bf16.msra.mxu0 0
    %564 = vmatprep.subr.bf16.mxu0 0
    %565 = vmatpush2.bf16.msra.mxu0 0
    %566 = vmatprep.mubr.bf16.mxu0 0
    %567 = vmatmul.mubr.bf16.gmra.mxu0 %v532
    %v568 = vpop.f32.mrf.mxu0
    %v569 = vadd.f32 %v512, %v568
    %v570 = vpop.f32.mrf.mxu0
    %v571 = vpop.f32.mrf.mxu0
    %v572 = vadd.f32 %v512, %v571
    %v573 = vpop.f32.mrf.mxu0
    %574 = vdwg.mxu0
    %v575 = vpack.c.bf16 %v499, %v495
    %v576 = vpack.c.bf16 %v501, %v497
    %v577 = vld [vmem:[#allocation10] sm:$0xf]
    %v578 = vld [vmem:[#allocation10 + $0x4] sm:$0xf]
    %v579 = vld [vmem:[#allocation10 + $0x8] sm:$0xf]
    %v580 = vld [vmem:[#allocation10 + $0xc] sm:$0xf]
    %v581 = vld [vmem:[#allocation10 + $0x10] sm:$0xf]
    %v582 = vld [vmem:[#allocation10 + $0x14] sm:$0xf]
    %v583 = vld [vmem:[#allocation10 + $0x18] sm:$0xf]
    %v584 = vld [vmem:[#allocation10 + $0x1c] sm:$0xf]
    %v585 = vld [vmem:[#allocation10 + $0x20] sm:$0xf]
    %v586 = vld [vmem:[#allocation10 + $0x24] sm:$0xf]
    %v587 = vld [vmem:[#allocation10 + $0x28] sm:$0xf]
    %v588 = vld [vmem:[#allocation10 + $0x2c] sm:$0xf]
    %v589 = vld [vmem:[#allocation10 + $0x30] sm:$0xf]
    %v590 = vld [vmem:[#allocation10 + $0x34] sm:$0xf]
    %v591 = vld [vmem:[#allocation10 + $0x38] sm:$0xf]
    %v592 = vld [vmem:[#allocation10 + $0x3c] sm:$0xf]
    %v609 = vunpack.c.l.b16 %v577
    %v610 = vunpack.c.l.b16 %v578
    %v611 = vunpack.c.l.b16 %v579
    %v612 = vunpack.c.l.b16 %v580
    %v613 = vunpack.c.l.b16 %v581
    %v614 = vunpack.c.l.b16 %v582
    %v615 = vunpack.c.l.b16 %v583
    %v616 = vunpack.c.l.b16 %v584
    %v617 = vunpack.c.l.b16 %v585
    %v618 = vunpack.c.l.b16 %v586
    %v619 = vunpack.c.l.b16 %v587
    %v620 = vunpack.c.l.b16 %v588
    %v621 = vunpack.c.l.b16 %v589
    %v622 = vunpack.c.l.b16 %v590
    %v623 = vunpack.c.l.b16 %v591
    %v624 = vunpack.c.l.b16 %v592
    %v625 = vpack.c.b16 %v610, %v609
    %v626 = vpack.c.b16 %v612, %v611
    %v627 = vpack.c.b16 %v614, %v613
    %v628 = vpack.c.b16 %v616, %v615
    %v629 = vpack.c.b16 %v618, %v617
    %v630 = vpack.c.b16 %v620, %v619
    %v631 = vpack.c.b16 %v622, %v621
    %v632 = vpack.c.b16 %v624, %v623
    %641 = vmatprep.subr.bf16.mxu0 0
    %642 = vmatpush1.bf16.msra.mxu0 %v632
    %643 = vmatprep.subr.bf16.mxu0 0
    %644 = vmatpush1.bf16.msra.mxu0 %v631
    %645 = vmatprep.subr.bf16.mxu0 0
    %646 = vmatpush1.bf16.msra.mxu0 %v630
    %647 = vmatprep.subr.bf16.mxu0 0
    %648 = vmatpush1.bf16.msra.mxu0 %v629
    %649 = vmatprep.subr.bf16.mxu0 0
    %650 = vmatpush1.bf16.msra.mxu0 %v628
    %651 = vmatprep.subr.bf16.mxu0 0
    %652 = vmatpush1.bf16.msra.mxu0 %v627
    %653 = vmatprep.subr.bf16.mxu0 0
    %654 = vmatpush1.bf16.msra.mxu0 %v626
    %655 = vmatprep.subr.bf16.mxu0 0
    %656 = vmatpush1.bf16.msra.mxu0 %v625
    %657 = vmatprep.subr.bf16.mxu0 0
    %658 = vmatpush2.bf16.msra.mxu0 0
    %659 = vmatprep.subr.bf16.mxu0 0
    %660 = vmatpush2.bf16.msra.mxu0 0
    %661 = vmatprep.subr.bf16.mxu0 0
    %662 = vmatpush2.bf16.msra.mxu0 0
    %663 = vmatprep.subr.bf16.mxu0 0
    %664 = vmatpush2.bf16.msra.mxu0 0
    %665 = vmatprep.subr.bf16.mxu0 0
    %666 = vmatpush2.bf16.msra.mxu0 0
    %667 = vmatprep.subr.bf16.mxu0 0
    %668 = vmatpush2.bf16.msra.mxu0 0
    %669 = vmatprep.subr.bf16.mxu0 0
    %670 = vmatpush2.bf16.msra.mxu0 0
    %671 = vmatprep.subr.bf16.mxu0 0
    %672 = vmatpush2.bf16.msra.mxu0 0
    %673 = vmatprep.mubr.bf16.mxu0 0
    %674 = vmatmul.mubr.bf16.gmra.mxu0 %v575
    %v675 = vpop.f32.mrf.mxu0
    %v676 = vadd.f32 %v569, %v675
    %v677 = vpop.f32.mrf.mxu0
    %v678 = vpop.f32.mrf.mxu0
    %v679 = vadd.f32 %v572, %v678
    %v680 = vpop.f32.mrf.mxu0
    %681 = vmatprep.mubr.bf16.mxu0 0
    %682 = vmatmul.mubr.bf16.gmra.mxu0 %v576
    %v683 = vpop.f32.mrf.mxu0
    %v684 = vadd.f32 %v569, %v683
    %v685 = vpop.f32.mrf.mxu0
    %v686 = vpop.f32.mrf.mxu0
    %v687 = vadd.f32 %v572, %v686
    %v688 = vpop.f32.mrf.mxu0
    %689 = vdwg.mxu0
    %v690 = vmax.f32 %v676, 0.0
    %v691 = vmax.f32 %v679, 0.0
    %v692 = vmax.f32 %v684, 0.0
    %v693 = vmax.f32 %v687, 0.0
    %v694 = vadd.f32 %v690, %v692
    %v695 = vadd.f32 %v691, %v693
    %v696 = vpack.c.bf16 %v695, %v694
    %v697 = vld [vmem:[#allocation13] sm:$0xf]
    %v698 = vld [vmem:[#allocation13 + $0x4] sm:$0xf]
    %v699 = vld [vmem:[#allocation13 + $0x8] sm:$0xf]
    %v700 = vld [vmem:[#allocation13 + $0xc] sm:$0xf]
    %v701 = vld [vmem:[#allocation13 + $0x10] sm:$0xf]
    %v702 = vld [vmem:[#allocation13 + $0x14] sm:$0xf]
    %v703 = vld [vmem:[#allocation13 + $0x18] sm:$0xf]
    %v704 = vld [vmem:[#allocation13 + $0x1c] sm:$0xf]
    %v705 = vld [vmem:[#allocation13 + $0x20] sm:$0xf]
    %v706 = vld [vmem:[#allocation13 + $0x24] sm:$0xf]
    %v707 = vld [vmem:[#allocation13 + $0x28] sm:$0xf]
    %v708 = vld [vmem:[#allocation13 + $0x2c] sm:$0xf]
    %v709 = vld [vmem:[#allocation13 + $0x30] sm:$0xf]
    %v710 = vld [vmem:[#allocation13 + $0x34] sm:$0xf]
    %v711 = vld [vmem:[#allocation13 + $0x38] sm:$0xf]
    %v712 = vld [vmem:[#allocation13 + $0x3c] sm:$0xf]
    %v713 = vld [vmem:[%s10] sm:$0x1]
    %v715 = vlaneseq
    %v716 = vshrl.u32 %v715, 7
    %v717 = vsub.s32 0, %v716
    %v718 = vrot.slane %v713, %v717
    %v736 = vunpack.c.l.b16 %v697
    %v737 = vunpack.c.l.b16 %v698
    %v738 = vunpack.c.l.b16 %v699
    %v739 = vunpack.c.l.b16 %v700
    %v740 = vunpack.c.l.b16 %v701
    %v741 = vunpack.c.l.b16 %v702
    %v742 = vunpack.c.l.b16 %v703
    %v743 = vunpack.c.l.b16 %v704
    %v744 = vunpack.c.l.b16 %v705
    %v745 = vunpack.c.l.b16 %v706
    %v746 = vunpack.c.l.b16 %v707
    %v747 = vunpack.c.l.b16 %v708
    %v748 = vunpack.c.l.b16 %v709
    %v749 = vunpack.c.l.b16 %v710
    %v750 = vunpack.c.l.b16 %v711
    %v751 = vunpack.c.l.b16 %v712
    %v752 = vpack.c.b16 %v737, %v736
    %v753 = vpack.c.b16 %v739, %v738
    %v754 = vpack.c.b16 %v741, %v740
    %v755 = vpack.c.b16 %v743, %v742
    %v756 = vpack.c.b16 %v745, %v744
    %v757 = vpack.c.b16 %v747, %v746
    %v758 = vpack.c.b16 %v749, %v748
    %v759 = vpack.c.b16 %v751, %v750
    %768 = vmatprep.subr.bf16.mxu0 0
    %769 = vmatpush1.bf16.msra.mxu0 %v759
    %770 = vmatprep.subr.bf16.mxu0 0
    %771 = vmatpush1.bf16.msra.mxu0 %v758
    %772 = vmatprep.subr.bf16.mxu0 0
    %773 = vmatpush1.bf16.msra.mxu0 %v757
    %774 = vmatprep.subr.bf16.mxu0 0
    %775 = vmatpush1.bf16.msra.mxu0 %v756
    %776 = vmatprep.subr.bf16.mxu0 0
    %777 = vmatpush1.bf16.msra.mxu0 %v755
    %778 = vmatprep.subr.bf16.mxu0 0
    %779 = vmatpush1.bf16.msra.mxu0 %v754
    %780 = vmatprep.subr.bf16.mxu0 0
    %781 = vmatpush1.bf16.msra.mxu0 %v753
    %782 = vmatprep.subr.bf16.mxu0 0
    %783 = vmatpush1.bf16.msra.mxu0 %v752
    %784 = vmatprep.subr.bf16.mxu0 0
    %785 = vmatpush2.bf16.msra.mxu0 0
    %786 = vmatprep.subr.bf16.mxu0 0
    %787 = vmatpush2.bf16.msra.mxu0 0
    %788 = vmatprep.subr.bf16.mxu0 0
    %789 = vmatpush2.bf16.msra.mxu0 0
    %790 = vmatprep.subr.bf16.mxu0 0
    %791 = vmatpush2.bf16.msra.mxu0 0
    %792 = vmatprep.subr.bf16.mxu0 0
    %793 = vmatpush2.bf16.msra.mxu0 0
    %794 = vmatprep.subr.bf16.mxu0 0
    %795 = vmatpush2.bf16.msra.mxu0 0
    %796 = vmatprep.subr.bf16.mxu0 0
    %797 = vmatpush2.bf16.msra.mxu0 0
    %798 = vmatprep.subr.bf16.mxu0 0
    %799 = vmatpush2.bf16.msra.mxu0 0
    %800 = vmatprep.mubr.bf16.mxu0 0
    %801 = vmatmul.mubr.bf16.gmra.mxu0 %v696
    %v802 = vpop.f32.mrf.mxu0
    %v803 = vadd.f32 %v718, %v802
    %v804 = vpop.f32.mrf.mxu0
    %v805 = vpop.f32.mrf.mxu0
    %v806 = vadd.f32 %v718, %v805
    %v807 = vpop.f32.mrf.mxu0
    %808 = vdwg.mxu0
    %809 = vst [vmem:[#allocation16] sm:$0xff] %v803
    %810 = vst [vmem:[#allocation16 + $0x8] sm:$0xff] %v806
    %v811 = vpack.c.bf16 %v806, %v803
    %v812 = vld [vmem:[#allocation14] sm:$0xf]
    %v813 = vld [vmem:[#allocation14 + $0x4] sm:$0xf]
    %v814 = vld [vmem:[#allocation14 + $0x8] sm:$0xf]
    %v815 = vld [vmem:[#allocation14 + $0xc] sm:$0xf]
    %v816 = vld [vmem:[#allocation14 + $0x10] sm:$0xf]
    %v817 = vld [vmem:[#allocation14 + $0x14] sm:$0xf]
    %v818 = vld [vmem:[#allocation14 + $0x18] sm:$0xf]
    %v819 = vld [vmem:[#allocation14 + $0x1c] sm:$0xf]
    %v820 = vld [vmem:[#allocation14 + $0x20] sm:$0xf]
    %v821 = vld [vmem:[#allocation14 + $0x24] sm:$0xf]
    %v822 = vld [vmem:[#allocation14 + $0x28] sm:$0xf]
    %v823 = vld [vmem:[#allocation14 + $0x2c] sm:$0xf]
    %v824 = vld [vmem:[#allocation14 + $0x30] sm:$0xf]
    %v825 = vld [vmem:[#allocation14 + $0x34] sm:$0xf]
    %v826 = vld [vmem:[#allocation14 + $0x38] sm:$0xf]
    %v827 = vld [vmem:[#allocation14 + $0x3c] sm:$0xf]
    %v828 = vld [vmem:[%s12] sm:$0x1]
    %v830 = vlaneseq
    %v831 = vshrl.u32 %v830, 7
    %v832 = vsub.s32 0, %v831
    %v833 = vrot.slane %v828, %v832
    %v851 = vunpack.c.l.b16 %v812
    %v852 = vunpack.c.l.b16 %v813
    %v853 = vunpack.c.l.b16 %v814
    %v854 = vunpack.c.l.b16 %v815
    %v855 = vunpack.c.l.b16 %v816
    %v856 = vunpack.c.l.b16 %v817
    %v857 = vunpack.c.l.b16 %v818
    %v858 = vunpack.c.l.b16 %v819
    %v859 = vunpack.c.l.b16 %v820
    %v860 = vunpack.c.l.b16 %v821
    %v861 = vunpack.c.l.b16 %v822
    %v862 = vunpack.c.l.b16 %v823
    %v863 = vunpack.c.l.b16 %v824
    %v864 = vunpack.c.l.b16 %v825
    %v865 = vunpack.c.l.b16 %v826
    %v866 = vunpack.c.l.b16 %v827
    %v867 = vpack.c.b16 %v852, %v851
    %v868 = vpack.c.b16 %v854, %v853
    %v869 = vpack.c.b16 %v856, %v855
    %v870 = vpack.c.b16 %v858, %v857
    %v871 = vpack.c.b16 %v860, %v859
    %v872 = vpack.c.b16 %v862, %v861
    %v873 = vpack.c.b16 %v864, %v863
    %v874 = vpack.c.b16 %v866, %v865
    %883 = vmatprep.subr.bf16.mxu0 0
    %884 = vmatpush1.bf16.msra.mxu0 %v874
    %885 = vmatprep.subr.bf16.mxu0 0
    %886 = vmatpush1.bf16.msra.mxu0 %v873
    %887 = vmatprep.subr.bf16.mxu0 0
    %888 = vmatpush1.bf16.msra.mxu0 %v872
    %889 = vmatprep.subr.bf16.mxu0 0
    %890 = vmatpush1.bf16.msra.mxu0 %v871
    %891 = vmatprep.subr.bf16.mxu0 0
    %892 = vmatpush1.bf16.msra.mxu0 %v870
    %893 = vmatprep.subr.bf16.mxu0 0
    %894 = vmatpush1.bf16.msra.mxu0 %v869
    %895 = vmatprep.subr.bf16.mxu0 0
    %896 = vmatpush1.bf16.msra.mxu0 %v868
    %897 = vmatprep.subr.bf16.mxu0 0
    %898 = vmatpush1.bf16.msra.mxu0 %v867
    %899 = vmatprep.subr.bf16.mxu0 0
    %900 = vmatpush2.bf16.msra.mxu0 0
    %901 = vmatprep.subr.bf16.mxu0 0
    %902 = vmatpush2.bf16.msra.mxu0 0
    %903 = vmatprep.subr.bf16.mxu0 0
    %904 = vmatpush2.bf16.msra.mxu0 0
    %905 = vmatprep.subr.bf16.mxu0 0
    %906 = vmatpush2.bf16.msra.mxu0 0
    %907 = vmatprep.subr.bf16.mxu0 0
    %908 = vmatpush2.bf16.msra.mxu0 0
    %909 = vmatprep.subr.bf16.mxu0 0
    %910 = vmatpush2.bf16.msra.mxu0 0
    %911 = vmatprep.subr.bf16.mxu0 0
    %912 = vmatpush2.bf16.msra.mxu0 0
    %913 = vmatprep.subr.bf16.mxu0 0
    %914 = vmatpush2.bf16.msra.mxu0 0
    %915 = vmatprep.mubr.bf16.mxu0 0
    %916 = vmatmul.mubr.bf16.gmra.mxu0 %v811
    %v917 = vpop.f32.mrf.mxu0
    %v918 = vadd.f32 %v833, %v917
    %v919 = vpop.f32.mrf.mxu0
    %v920 = vpop.f32.mrf.mxu0
    %v921 = vadd.f32 %v833, %v920
    %v922 = vpop.f32.mrf.mxu0
    %923 = vdwg.mxu0
    %924 = vst [vmem:[#allocation17] sm:$0xff] %v918
    %925 = vst [vmem:[#allocation17 + $0x8] sm:$0xff] %v921
    // Predicated region
    $region86: #{tpu_custom_call.1} parent=1 // pred_check
      _
    $region87: #{tpu_custom_call.1} parent=1 // pred_check_branch
      %927 = sbr.rel (0) target = $region89
    $region88: #{tpu_custom_call.1} parent=1 // pred_region
      %s929 = ssub.s32 256, 256
      %930 = vsyncadd [#allocation4], %s929
      %s931 = sshll.u32 [#allocation16], 4
      %s932 = int_to_ptr.vmem [resolvable:$true] %s931
      %937 = dma.vmem_to_hbm [thread:$0]  %s932, 256, %s13, [#allocation4], 128, 128, 8
    $region89: #{tpu_custom_call.1} parent=1 // pred_fallthru
      _
    // Predicated region
    $region90: #{tpu_custom_call.1} parent=1 // pred_check
      _
    $region91: #{tpu_custom_call.1} parent=1 // pred_check_branch
      %939 = sbr.rel (0) target = $region93
    $region92: #{tpu_custom_call.1} parent=1 // pred_region
      %s941 = ssub.s32 256, 256
      %942 = vsyncadd [#allocation18], %s941
      %s943 = sshll.u32 [#allocation17], 4
      %s944 = int_to_ptr.vmem [resolvable:$true] %s943
      %949 = dma.vmem_to_hbm [thread:$0]  %s944, 256, %s14, [#allocation18], 128, 128, 8
    $region93: #{tpu_custom_call.1} parent=1 // pred_fallthru
      _
    // Predicated region
    $region94: #{tpu_custom_call.1} parent=1 // pred_check
      _
    $region95: #{tpu_custom_call.1} parent=1 // pred_check_branch
      %951 = sbr.rel (0) target = $region97
    $region96: #{tpu_custom_call.1} parent=1 // pred_region
      %952 = dma.done [#allocation4], 256
    $region97: #{tpu_custom_call.1} parent=1 // pred_fallthru
      _
    // Predicated region
    $region98: #{tpu_custom_call.1} parent=1 // pred_check
      _
    $region99: #{tpu_custom_call.1} parent=1 // pred_check_branch
      %954 = sbr.rel (0) target = $region101
    $region100: #{tpu_custom_call.1} parent=1 // pred_region
      %955 = dma.done [#allocation18], 256
    $region101: #{tpu_custom_call.1} parent=1 // pred_fallthru
      _
    %956 = vsyncpa [#allocation3], 1
    %957 = vsyncpa [#allocation6], 1
    %958 = vsyncpa [#allocation9], 1
    %959 = vsyncpa [#allocation12], 1
    %960 = vsyncpa [#allocation15], 1
    %961 = vsyncpa [#allocation4], 1
    %962 = vsyncpa [#allocation18], 1

// kernel: tpu_custom_call.1
$region0: #{tpu_custom_call.1}
  #allocation0 [shape = 'u32[]', space=smem, size = 0x4, offset = 0x4, fixed_abs, tag = 'smem constant byte address 0x4 - core index']
  #allocation1 [shape = 'u32[144,128]{1,0:T(1,128)}', space=vmem, size = 0x12000, scoped, tag = 'internal scratch']
  %s0 = inlined_call_operand.hbm [shape: bf16[16,32], index: 0, kind: input, shape index: {}]
  %s1 = inlined_call_operand.hbm [shape: bf16[16,32], index: 1, kind: input, shape index: {}]
  %s2 = inlined_call_operand.hbm [shape: bf16[32,256], index: 2, kind: input, shape index: {}]
  %s3 = inlined_call_operand.vmem [shape: f32[1,256], index: 3, kind: input, shape index: {}]
  %s4 = inlined_call_operand.hbm [shape: bf16[256,256], index: 4, kind: input, shape index: {}]
  %s5 = inlined_call_operand.vmem [shape: f32[1,256], index: 5, kind: input, shape index: {}]
  %s6 = inlined_call_operand.hbm [shape: bf16[128,128], index: 6, kind: input, shape index: {}]
  %s7 = inlined_call_operand.hbm [shape: bf16[32,128], index: 7, kind: input, shape index: {}]
  %s8 = inlined_call_operand.vmem [shape: f32[1,128], index: 8, kind: input, shape index: {}]
  %s9 = inlined_call_operand.hbm [shape: bf16[128,128], index: 9, kind: input, shape index: {}]
  %s10 = inlined_call_operand.vmem [shape: f32[1,128], index: 10, kind: input, shape index: {}]
  %s11 = inlined_call_operand.hbm [shape: bf16[128,128], index: 11, kind: input, shape index: {}]
  %s12 = inlined_call_operand.vmem [shape: f32[1,128], index: 12, kind: input, shape index: {}]
  %s13 = inlined_call_operand.hbm [shape: f32[16,128], index: 13, kind: output, shape index: {0}]
  %s14 = inlined_call_operand.hbm [shape: f32[16,128], index: 14, kind: output, shape index: {1}]
  %15 = xla_tuple %s13, %s14
  %s16 = sld [smem:[#allocation0]]
  $region102: #{tpu_custom_call.1} parent=0
    _
  %s18 = ssub.s32 1, %s16
  %s19 = scalar_select 0, %s18, %s16
  $region1: #{tpu_custom_call.1} parent=0
    #allocation2 [shape = 'u8[4096]{0}', space=vmem, size = 0x1000, scoped, tag = 'input window, operand 0, single buffered']
    #allocation3 [shape = 's32[1]{0}', space=sflag, size = 0x4, scoped, tag = 'scoped memory for tpu_custom_call.1']
    #allocation4 [shape = 's32[1]{0}', space=sflag, size = 0x4, scoped, tag = 'scoped memory for tpu_custom_call.1']
    #allocation5 [shape = 'u8[4096]{0}', space=vmem, size = 0x1000, scoped, tag = 'input window, operand 1, single buffered']
    #allocation6 [shape = 's32[1]{0}', space=sflag, size = 0x4, scoped, tag = 'scoped memory for tpu_custom_call.1']
    #allocation7 [shape = 'u8[16384]{0}', space=vmem, size = 0x4000, scoped, tag = 'input window, operand 2, single buffered']
    #allocation8 [shape = 'u8[131072]{0}', space=vmem, size = 0x20000, scoped, tag = 'input window, operand 4, single buffered']
    #allocation9 [shape = 's32[1]{0}', space=sflag, size = 0x4, scoped, tag = 'scoped memory for tpu_custom_call.1']
    #allocation10 [shape = 'u8[32768]{0}', space=vmem, size = 0x8000, scoped, tag = 'input window, operand 6, single buffered']
    #allocation11 [shape = 'u8[8192]{0}', space=vmem, size = 0x2000, scoped, tag = 'input window, operand 7, single buffered']
    #allocation12 [shape = 's32[1]{0}', space=sflag, size = 0x4, scoped, tag = 'scoped memory for tpu_custom_call.1']
    #allocation13 [shape = 'u8[32768]{0}', space=vmem, size = 0x8000, scoped, tag = 'input window, operand 9, single buffered']
    #allocation14 [shape = 'u8[32768]{0}', space=vmem, size = 0x8000, scoped, tag = 'input window, operand 11, single buffered']
    #allocation15 [shape = 's32[1]{0}', space=sflag, size = 0x4, scoped, tag = 'scoped memory for tpu_custom_call.1']
    #allocation16 [shape = 'u8[8192]{0}', space=vmem, size = 0x2000, scoped, tag = 'output window, operand 0, single buffered']
    #allocation17 [shape = 'u8[8192]{0}', space=vmem, size = 0x2000, scoped, tag = 'output window, operand 1, single buffered']
    #allocation18 [shape = 's32[1]{0}', space=sflag, size = 0x4, scoped, tag = 'scoped memory for tpu_custom_call.1']
    %20 = vsyncpa [#allocation3], 0
    %21 = vsyncpa [#allocation6], 0
    %22 = vsyncpa [#allocation9], 0
    %23 = vsyncpa [#allocation12], 0
    %24 = vsyncpa [#allocation15], 0
    %25 = vsyncpa [#allocation4], 0
    %26 = vsyncpa [#allocation18], 0
    // Predicated region
    $region2: #{tpu_custom_call.1} parent=1 // pred_check
      _
    $region3: #{tpu_custom_call.1} parent=1 // pred_check_branch
      %28 = sbr.rel (0) target = $region5
    $region4: #{tpu_custom_call.1} parent=1 // pred_region
      %s30 = ssub.s32 128, 128
      %31 = vsyncadd [#allocation3], %s30
      %s32 = sshll.u32 [#allocation2], 4
      %s33 = int_to_ptr.vmem [resolvable:$true] %s32
      %38 = dma.hbm_to_vmem [thread:$0]  %s0, 128, %s33, [#allocation3], 64, 64, 4
    $region5: #{tpu_custom_call.1} parent=1 // pred_fallthru
      _
    // Predicated region
    $region6: #{tpu_custom_call.1} parent=1 // pred_check
      _
    $region7: #{tpu_custom_call.1} parent=1 // pred_check_branch
      %40 = sbr.rel (0) target = $region9
    $region8: #{tpu_custom_call.1} parent=1 // pred_region
      %s42 = ssub.s32 128, 128
      %43 = vsyncadd [#allocation6], %s42
      %s44 = sshll.u32 [#allocation5], 4
      %s45 = int_to_ptr.vmem [resolvable:$true] %s44
      %50 = dma.hbm_to_vmem [thread:$0]  %s1, 128, %s45, [#allocation6], 64, 64, 4
    $region9: #{tpu_custom_call.1} parent=1 // pred_fallthru
      _
    // Predicated region
    $region10: #{tpu_custom_call.1} parent=1 // pred_check
      _
    $region11: #{tpu_custom_call.1} parent=1 // pred_check_branch
      %52 = sbr.rel (0) target = $region13
    $region12: #{tpu_custom_call.1} parent=1 // pred_region
      %s54 = ssub.s32 512, 512
      %55 = vsyncadd [#allocation6], %s54
      %s56 = sshll.u32 [#allocation7], 4
      %s57 = int_to_ptr.vmem [resolvable:$true] %s56
      %62 = dma.hbm_to_vmem [thread:$0]  %s2, 512, %s57, [#allocation6], 128, 128, 8
    $region13: #{tpu_custom_call.1} parent=1 // pred_fallthru
      _
    // Predicated region
    $region14: #{tpu_custom_call.1} parent=1 // pred_check
      _
    $region15: #{tpu_custom_call.1} parent=1 // pred_check_branch
      %64 = sbr.rel (0) target = $region17
    $region16: #{tpu_custom_call.1} parent=1 // pred_region
      _
    $region17: #{tpu_custom_call.1} parent=1 // pred_fallthru
      _
    // Predicated region
    $region18: #{tpu_custom_call.1} parent=1 // pred_check
      _
    $region19: #{tpu_custom_call.1} parent=1 // pred_check_branch
      %66 = sbr.rel (0) target = $region21
    $region20: #{tpu_custom_call.1} parent=1 // pred_region
      %s68 = ssub.s32 4096, 4096
      %69 = vsyncadd [#allocation9], %s68
      %s70 = sshll.u32 [#allocation8], 4
      %s71 = int_to_ptr.vmem [resolvable:$true] %s70
      %76 = dma.hbm_to_vmem [thread:$0]  %s4, 4096, %s71, [#allocation9], 128, 128, 8
    $region21: #{tpu_custom_call.1} parent=1 // pred_fallthru
      _
    // Predicated region
    $region22: #{tpu_custom_call.1} parent=1 // pred_check
      _
    $region23: #{tpu_custom_call.1} parent=1 // pred_check_branch
      %78 = sbr.rel (0) target = $region25
    $region24: #{tpu_custom_call.1} parent=1 // pred_region
      _
    $region25: #{tpu_custom_call.1} parent=1 // pred_fallthru
      _
    // Predicated region
    $region26: #{tpu_custom_call.1} parent=1 // pred_check
      _
    $region27: #{tpu_custom_call.1} parent=1 // pred_check_branch
      %80 = sbr.rel (0) target = $region29
    $region28: #{tpu_custom_call.1} parent=1 // pred_region
      %s82 = ssub.s32 1024, 1024
      %83 = vsyncadd [#allocation9], %s82
      %s84 = sshll.u32 [#allocation10], 4
      %s85 = int_to_ptr.vmem [resolvable:$true] %s84
      %90 = dma.hbm_to_vmem [thread:$0]  %s6, 1024, %s85, [#allocation9], 64, 64, 4
    $region29: #{tpu_custom_call.1} parent=1 // pred_fallthru
      _
    // Predicated region
    $region30: #{tpu_custom_call.1} parent=1 // pred_check
      _
    $region31: #{tpu_custom_call.1} parent=1 // pred_check_branch
      %92 = sbr.rel (0) target = $region33
    $region32: #{tpu_custom_call.1} parent=1 // pred_region
      %s94 = ssub.s32 256, 256
      %95 = vsyncadd [#allocation12], %s94
      %s96 = sshll.u32 [#allocation11], 4
      %s97 = int_to_ptr.vmem [resolvable:$true] %s96
      %102 = dma.hbm_to_vmem [thread:$0]  %s7, 256, %s97, [#allocation12], 64, 64, 4
    $region33: #{tpu_custom_call.1} parent=1 // pred_fallthru
      _
    // Predicated region
    $region34: #{tpu_custom_call.1} parent=1 // pred_check
      _
    $region35: #{tpu_custom_call.1} parent=1 // pred_check_branch
      %104 = sbr.rel (0) target = $region37
    $region36: #{tpu_custom_call.1} parent=1 // pred_region
      _
    $region37: #{tpu_custom_call.1} parent=1 // pred_fallthru
      _
    // Predicated region
    $region38: #{tpu_custom_call.1} parent=1 // pred_check
      _
    $region39: #{tpu_custom_call.1} parent=1 // pred_check_branch
      %106 = sbr.rel (0) target = $region41
    $region40: #{tpu_custom_call.1} parent=1 // pred_region
      %s108 = ssub.s32 1024, 1024
      %109 = vsyncadd [#allocation12], %s108
      %s110 = sshll.u32 [#allocation13], 4
      %s111 = int_to_ptr.vmem [resolvable:$true] %s110
      %116 = dma.hbm_to_vmem [thread:$0]  %s9, 1024, %s111, [#allocation12], 64, 64, 4
    $region41: #{tpu_custom_call.1} parent=1 // pred_fallthru
      _
    // Predicated region
    $region42: #{tpu_custom_call.1} parent=1 // pred_check
      _
    $region43: #{tpu_custom_call.1} parent=1 // pred_check_branch
      %118 = sbr.rel (0) target = $region45
    $region44: #{tpu_custom_call.1} parent=1 // pred_region
      _
    $region45: #{tpu_custom_call.1} parent=1 // pred_fallthru
      _
    // Predicated region
    $region46: #{tpu_custom_call.1} parent=1 // pred_check
      _
    $region47: #{tpu_custom_call.1} parent=1 // pred_check_branch
      %120 = sbr.rel (0) target = $region49
    $region48: #{tpu_custom_call.1} parent=1 // pred_region
      %s122 = ssub.s32 1024, 1024
      %123 = vsyncadd [#allocation15], %s122
      %s124 = sshll.u32 [#allocation14], 4
      %s125 = int_to_ptr.vmem [resolvable:$true] %s124
      %130 = dma.hbm_to_vmem [thread:$0]  %s11, 1024, %s125, [#allocation15], 64, 64, 4
    $region49: #{tpu_custom_call.1} parent=1 // pred_fallthru
      _
    // Predicated region
    $region50: #{tpu_custom_call.1} parent=1 // pred_check
      _
    $region51: #{tpu_custom_call.1} parent=1 // pred_check_branch
      %132 = sbr.rel (0) target = $region53
    $region52: #{tpu_custom_call.1} parent=1 // pred_region
      _
    $region53: #{tpu_custom_call.1} parent=1 // pred_fallthru
      _
    // Predicated region
    $region54: #{tpu_custom_call.1} parent=1 // pred_check
      _
    $region55: #{tpu_custom_call.1} parent=1 // pred_check_branch
      %134 = sbr.rel (0) target = $region57
    $region56: #{tpu_custom_call.1} parent=1 // pred_region
      %135 = dma.done [#allocation3], 128
    $region57: #{tpu_custom_call.1} parent=1 // pred_fallthru
      _
    // Predicated region
    $region58: #{tpu_custom_call.1} parent=1 // pred_check
      _
    $region59: #{tpu_custom_call.1} parent=1 // pred_check_branch
      %137 = sbr.rel (0) target = $region61
    $region60: #{tpu_custom_call.1} parent=1 // pred_region
      %138 = dma.done [#allocation6], 128
    $region61: #{tpu_custom_call.1} parent=1 // pred_fallthru
      _
    // Predicated region
    $region62: #{tpu_custom_call.1} parent=1 // pred_check
      _
    $region63: #{tpu_custom_call.1} parent=1 // pred_check_branch
      %140 = sbr.rel (0) target = $region65
    $region64: #{tpu_custom_call.1} parent=1 // pred_region
      %141 = dma.done [#allocation6], 512
    $region65: #{tpu_custom_call.1} parent=1 // pred_fallthru
      _
    // Predicated region
    $region66: #{tpu_custom_call.1} parent=1 // pred_check
      _
    $region67: #{tpu_custom_call.1} parent=1 // pred_check_branch
      %143 = sbr.rel (0) target = $region69
    $region68: #{tpu_custom_call.1} parent=1 // pred_region
      %144 = dma.done [#allocation9], 4096
    $region69: #{tpu_custom_call.1} parent=1 // pred_fallthru
      _
    // Predicated region
    $region70: #{tpu_custom_call.1} parent=1 // pred_check
      _
    $region71: #{tpu_custom_call.1} parent=1 // pred_check_branch
      %146 = sbr.rel (0) target = $region73
    $region72: #{tpu_custom_call.1} parent=1 // pred_region
      %147 = dma.done [#allocation9], 1024
    $region73: #{tpu_custom_call.1} parent=1 // pred_fallthru
      _
    // Predicated region
    $region74: #{tpu_custom_call.1} parent=1 // pred_check
      _
    $region75: #{tpu_custom_call.1} parent=1 // pred_check_branch
      %149 = sbr.rel (0) target = $region77
    $region76: #{tpu_custom_call.1} parent=1 // pred_region
      %150 = dma.done [#allocation12], 256
    $region77: #{tpu_custom_call.1} parent=1 // pred_fallthru
      _
    // Predicated region
    $region78: #{tpu_custom_call.1} parent=1 // pred_check
      _
    $region79: #{tpu_custom_call.1} parent=1 // pred_check_branch
      %152 = sbr.rel (0) target = $region81
    $region80: #{tpu_custom_call.1} parent=1 // pred_region
      %153 = dma.done [#allocation12], 1024
    $region81: #{tpu_custom_call.1} parent=1 // pred_fallthru
      _
    // Predicated region
    $region82: #{tpu_custom_call.1} parent=1 // pred_check
      _
    $region83: #{tpu_custom_call.1} parent=1 // pred_check_branch
      %155 = sbr.rel (0) target = $region85
    $region84: #{tpu_custom_call.1} parent=1 // pred_region
      %156 = dma.done [#allocation15], 1024
    $region85: #{tpu_custom_call.1} parent=1 // pred_fallthru
      _
    %v158 = vld [vmem:[#allocation2] sm:$0xf]
    %v159 = vld [vmem:[#allocation2 + $0x4] sm:$0xf]
    %v160 = vld [vmem:[#allocation5] sm:$0xf]
    %v161 = vld [vmem:[#allocation5 + $0x4] sm:$0xf]
    %v162 = vld [vmem:[#allocation7] sm:$0xff]
    %v163 = vld [vmem:[#allocation7 + $0x8] sm:$0xff]
    %v164 = vld [vmem:[#allocation7 + $0x10] sm:$0xff]
    %v165 = vld [vmem:[#allocation7 + $0x18] sm:$0xff]
    %v166 = vld [vmem:[%s3] sm:$0x3]
    %v168 = vlaneseq
    %v169 = vshrl.u32 %v168, 7
    %v170 = vsub.s32 0, %v169
    %v171 = vrot.slane %v166, %v170
    %v172 = vlaneseq
    %v173 = vshrl.u32 %v172, 7
    %v174 = vsub.s32 1, %v173
    %v175 = vrot.slane %v166, %v174
    %v180 = vunpack.c.l.b16 %v158
    %v181 = vunpack.c.l.b16 %v159
    %v182 = vpack.c.b16 %v181, %v180
    %v187 = vunpack.c.l.b16 %v162
    %v188 = vunpack.c.h.b16 %v162
    %v189 = vunpack.c.l.b16 %v163
    %v190 = vunpack.c.h.b16 %v163
    %v191 = vunpack.c.l.b16 %v164
    %v192 = vunpack.c.h.b16 %v164
    %v193 = vunpack.c.l.b16 %v165
    %v194 = vunpack.c.h.b16 %v165
    %v195 = vpack.c.b16 %v189, %v187
    %v196 = vpack.c.b16 %v190, %v188
    %v197 = vpack.c.b16 %v193, %v191
    %v198 = vpack.c.b16 %v194, %v192
    %vm203 = vcmask 261120
    %v205 = vsel %vm203, %v182, 0
    %207 = vmatprep.subr.bf16.mxu0 0
    %208 = vmatpush1.bf16.msra.mxu0 0
    %209 = vmatprep.subr.bf16.mxu0 0
    %210 = vmatpush1.bf16.msra.mxu0 0
    %211 = vmatprep.subr.bf16.mxu0 0
    %212 = vmatpush1.bf16.msra.mxu0 0
    %213 = vmatprep.subr.bf16.mxu0 0
    %214 = vmatpush1.bf16.msra.mxu0 0
    %215 = vmatprep.subr.bf16.mxu0 0
    %216 = vmatpush1.bf16.msra.mxu0 0
    %217 = vmatprep.subr.bf16.mxu0 0
    %218 = vmatpush1.bf16.msra.mxu0 0
    %219 = vmatprep.subr.bf16.mxu0 %v198
    %220 = vmatpush1.bf16.msra.mxu0 %v197
    %221 = vmatprep.subr.bf16.mxu0 %v196
    %222 = vmatpush1.bf16.msra.mxu0 %v195
    %223 = vmatprep.subr.bf16.mxu0 0
    %224 = vmatpush2.bf16.msra.mxu0 0
    %225 = vmatprep.subr.bf16.mxu0 0
    %226 = vmatpush2.bf16.msra.mxu0 0
    %227 = vmatprep.subr.bf16.mxu0 0
    %228 = vmatpush2.bf16.msra.mxu0 0
    %229 = vmatprep.subr.bf16.mxu0 0
    %230 = vmatpush2.bf16.msra.mxu0 0
    %231 = vmatprep.subr.bf16.mxu0 0
    %232 = vmatpush2.bf16.msra.mxu0 0
    %233 = vmatprep.subr.bf16.mxu0 0
    %234 = vmatpush2.bf16.msra.mxu0 0
    %235 = vmatprep.subr.bf16.mxu0 0
    %236 = vmatpush2.bf16.msra.mxu0 0
    %237 = vmatprep.subr.bf16.mxu0 0
    %238 = vmatpush2.bf16.msra.mxu0 0
    %239 = vmatprep.mubr.bf16.mxu0 0
    %240 = vmatmul.mubr.bf16.gmra.mxu0 %v205
    %v241 = vpop.f32.mrf.mxu0
    %v242 = vadd.f32 %v171, %v241
    %v243 = vpop.f32.mrf.mxu0
    %v244 = vadd.f32 %v175, %v243
    %v245 = vpop.f32.mrf.mxu0
    %v246 = vadd.f32 %v171, %v245
    %v247 = vpop.f32.mrf.mxu0
    %v248 = vadd.f32 %v175, %v247
    %249 = vdwg.mxu0
    %v250 = vmax.f32 %v242, 0.0
    %v251 = vmax.f32 %v244, 0.0
    %v252 = vmax.f32 %v246, 0.0
    %v253 = vmax.f32 %v248, 0.0
    %v254 = vpack.c.bf16 %v252, %v250
    %v255 = vpack.c.bf16 %v253, %v251
    %v256 = vld [vmem:[#allocation8] sm:$0xff]
    %v257 = vld [vmem:[#allocation8 + $0x8] sm:$0xff]
    %v258 = vld [vmem:[#allocation8 + $0x10] sm:$0xff]
    %v259 = vld [vmem:[#allocation8 + $0x18] sm:$0xff]
    %v260 = vld [vmem:[#allocation8 + $0x20] sm:$0xff]
    %v261 = vld [vmem:[#allocation8 + $0x28] sm:$0xff]
    %v262 = vld [vmem:[#allocation8 + $0x30] sm:$0xff]
    %v263 = vld [vmem:[#allocation8 + $0x38] sm:$0xff]
    %v264 = vld [vmem:[#allocation8 + $0x40] sm:$0xff]
    %v265 = vld [vmem:[#allocation8 + $0x48] sm:$0xff]
    %v266 = vld [vmem:[#allocation8 + $0x50] sm:$0xff]
    %v267 = vld [vmem:[#allocation8 + $0x58] sm:$0xff]
    %v268 = vld [vmem:[#allocation8 + $0x60] sm:$0xff]
    %v269 = vld [vmem:[#allocation8 + $0x68] sm:$0xff]
    %v270 = vld [vmem:[#allocation8 + $0x70] sm:$0xff]
    %v271 = vld [vmem:[#allocation8 + $0x78] sm:$0xff]
    %v272 = vld [vmem:[#allocation8 + $0x80] sm:$0xff]
    %v273 = vld [vmem:[#allocation8 + $0x88] sm:$0xff]
    %v274 = vld [vmem:[#allocation8 + $0x90] sm:$0xff]
    %v275 = vld [vmem:[#allocation8 + $0x98] sm:$0xff]
    %v276 = vld [vmem:[#allocation8 + $0xa0] sm:$0xff]
    %v277 = vld [vmem:[#allocation8 + $0xa8] sm:$0xff]
    %v278 = vld [vmem:[#allocation8 + $0xb0] sm:$0xff]
    %v279 = vld [vmem:[#allocation8 + $0xb8] sm:$0xff]
    %v280 = vld [vmem:[#allocation8 + $0xc0] sm:$0xff]
    %v281 = vld [vmem:[#allocation8 + $0xc8] sm:$0xff]
    %v282 = vld [vmem:[#allocation8 + $0xd0] sm:$0xff]
    %v283 = vld [vmem:[#allocation8 + $0xd8] sm:$0xff]
    %v284 = vld [vmem:[#allocation8 + $0xe0] sm:$0xff]
    %v285 = vld [vmem:[#allocation8 + $0xe8] sm:$0xff]
    %v286 = vld [vmem:[#allocation8 + $0xf0] sm:$0xff]
    %v287 = vld [vmem:[#allocation8 + $0xf8] sm:$0xff]
    %v288 = vld [vmem:[%s5] sm:$0x3]
    %v290 = vlaneseq
    %v291 = vshrl.u32 %v290, 7
    %v292 = vsub.s32 0, %v291
    %v293 = vrot.slane %v288, %v292
    %v294 = vlaneseq
    %v295 = vshrl.u32 %v294, 7
    %v296 = vsub.s32 1, %v295
    %v297 = vrot.slane %v288, %v296
    %v332 = vunpack.c.l.b16 %v256
    %v333 = vunpack.c.h.b16 %v256
    %v334 = vunpack.c.l.b16 %v257
    %v335 = vunpack.c.h.b16 %v257
    %v336 = vunpack.c.l.b16 %v258
    %v337 = vunpack.c.h.b16 %v258
    %v338 = vunpack.c.l.b16 %v259
    %v339 = vunpack.c.h.b16 %v259
    %v340 = vunpack.c.l.b16 %v260
    %v341 = vunpack.c.h.b16 %v260
    %v342 = vunpack.c.l.b16 %v261
    %v343 = vunpack.c.h.b16 %v261
    %v344 = vunpack.c.l.b16 %v262
    %v345 = vunpack.c.h.b16 %v262
    %v346 = vunpack.c.l.b16 %v263
    %v347 = vunpack.c.h.b16 %v263
    %v348 = vunpack.c.l.b16 %v264
    %v349 = vunpack.c.h.b16 %v264
    %v350 = vunpack.c.l.b16 %v265
    %v351 = vunpack.c.h.b16 %v265
    %v352 = vunpack.c.l.b16 %v266
    %v353 = vunpack.c.h.b16 %v266
    %v354 = vunpack.c.l.b16 %v267
    %v355 = vunpack.c.h.b16 %v267
    %v356 = vunpack.c.l.b16 %v268
    %v357 = vunpack.c.h.b16 %v268
    %v358 = vunpack.c.l.b16 %v269
    %v359 = vunpack.c.h.b16 %v269
    %v360 = vunpack.c.l.b16 %v270
    %v361 = vunpack.c.h.b16 %v270
    %v362 = vunpack.c.l.b16 %v271
    %v363 = vunpack.c.h.b16 %v271
    %v364 = vunpack.c.l.b16 %v272
    %v365 = vunpack.c.h.b16 %v272
    %v366 = vunpack.c.l.b16 %v273
    %v367 = vunpack.c.h.b16 %v273
    %v368 = vunpack.c.l.b16 %v274
    %v369 = vunpack.c.h.b16 %v274
    %v370 = vunpack.c.l.b16 %v275
    %v371 = vunpack.c.h.b16 %v275
    %v372 = vunpack.c.l.b16 %v276
    %v373 = vunpack.c.h.b16 %v276
    %v374 = vunpack.c.l.b16 %v277
    %v375 = vunpack.c.h.b16 %v277
    %v376 = vunpack.c.l.b16 %v278
    %v377 = vunpack.c.h.b16 %v278
    %v378 = vunpack.c.l.b16 %v279
    %v379 = vunpack.c.h.b16 %v279
    %v380 = vunpack.c.l.b16 %v280
    %v381 = vunpack.c.h.b16 %v280
    %v382 = vunpack.c.l.b16 %v281
    %v383 = vunpack.c.h.b16 %v281
    %v384 = vunpack.c.l.b16 %v282
    %v385 = vunpack.c.h.b16 %v282
    %v386 = vunpack.c.l.b16 %v283
    %v387 = vunpack.c.h.b16 %v283
    %v388 = vunpack.c.l.b16 %v284
    %v389 = vunpack.c.h.b16 %v284
    %v390 = vunpack.c.l.b16 %v285
    %v391 = vunpack.c.h.b16 %v285
    %v392 = vunpack.c.l.b16 %v286
    %v393 = vunpack.c.h.b16 %v286
    %v394 = vunpack.c.l.b16 %v287
    %v395 = vunpack.c.h.b16 %v287
    %v396 = vpack.c.b16 %v334, %v332
    %v397 = vpack.c.b16 %v335, %v333
    %v398 = vpack.c.b16 %v338, %v336
    %v399 = vpack.c.b16 %v339, %v337
    %v400 = vpack.c.b16 %v342, %v340
    %v401 = vpack.c.b16 %v343, %v341
    %v402 = vpack.c.b16 %v346, %v344
    %v403 = vpack.c.b16 %v347, %v345
    %v404 = vpack.c.b16 %v350, %v348
    %v405 = vpack.c.b16 %v351, %v349
    %v406 = vpack.c.b16 %v354, %v352
    %v407 = vpack.c.b16 %v355, %v353
    %v408 = vpack.c.b16 %v358, %v356
    %v409 = vpack.c.b16 %v359, %v357
    %v410 = vpack.c.b16 %v362, %v360
    %v411 = vpack.c.b16 %v363, %v361
    %v412 = vpack.c.b16 %v366, %v364
    %v413 = vpack.c.b16 %v367, %v365
    %v414 = vpack.c.b16 %v370, %v368
    %v415 = vpack.c.b16 %v371, %v369
    %v416 = vpack.c.b16 %v374, %v372
    %v417 = vpack.c.b16 %v375, %v373
    %v418 = vpack.c.b16 %v378, %v376
    %v419 = vpack.c.b16 %v379, %v377
    %v420 = vpack.c.b16 %v382, %v380
    %v421 = vpack.c.b16 %v383, %v381
    %v422 = vpack.c.b16 %v386, %v384
    %v423 = vpack.c.b16 %v387, %v385
    %v424 = vpack.c.b16 %v390, %v388
    %v425 = vpack.c.b16 %v391, %v389
    %v426 = vpack.c.b16 %v394, %v392
    %v427 = vpack.c.b16 %v395, %v393
    %460 = vmatprep.subr.bf16.mxu0 %v411
    %461 = vmatpush1.bf16.msra.mxu0 %v410
    %462 = vmatprep.subr.bf16.mxu0 %v409
    %463 = vmatpush1.bf16.msra.mxu0 %v408
    %464 = vmatprep.subr.bf16.mxu0 %v407
    %465 = vmatpush1.bf16.msra.mxu0 %v406
    %466 = vmatprep.subr.bf16.mxu0 %v405
    %467 = vmatpush1.bf16.msra.mxu0 %v404
    %468 = vmatprep.subr.bf16.mxu0 %v403
    %469 = vmatpush1.bf16.msra.mxu0 %v402
    %470 = vmatprep.subr.bf16.mxu0 %v401
    %471 = vmatpush1.bf16.msra.mxu0 %v400
    %472 = vmatprep.subr.bf16.mxu0 %v399
    %473 = vmatpush1.bf16.msra.mxu0 %v398
    %474 = vmatprep.subr.bf16.mxu0 %v397
    %475 = vmatpush1.bf16.msra.mxu0 %v396
    %476 = vmatprep.subr.bf16.mxu0 %v427
    %477 = vmatpush2.bf16.msra.mxu0 %v426
    %478 = vmatprep.subr.bf16.mxu0 %v425
    %479 = vmatpush2.bf16.msra.mxu0 %v424
    %480 = vmatprep.subr.bf16.mxu0 %v423
    %481 = vmatpush2.bf16.msra.mxu0 %v422
    %482 = vmatprep.subr.bf16.mxu0 %v421
    %483 = vmatpush2.bf16.msra.mxu0 %v420
    %484 = vmatprep.subr.bf16.mxu0 %v419
    %485 = vmatpush2.bf16.msra.mxu0 %v418
    %486 = vmatprep.subr.bf16.mxu0 %v417
    %487 = vmatpush2.bf16.msra.mxu0 %v416
    %488 = vmatprep.subr.bf16.mxu0 %v415
    %489 = vmatpush2.bf16.msra.mxu0 %v414
    %490 = vmatprep.subr.bf16.mxu0 %v413
    %491 = vmatpush2.bf16.msra.mxu0 %v412
    %492 = vmatprep.mubr.bf16.mxu0 %v255
    %493 = vmatmul.mubr.bf16.gmra.mxu0 %v254
    %v494 = vpop.f32.mrf.mxu0
    %v495 = vadd.f32 %v293, %v494
    %v496 = vpop.f32.mrf.mxu0
    %v497 = vadd.f32 %v297, %v496
    %v498 = vpop.f32.mrf.mxu0
    %v499 = vadd.f32 %v293, %v498
    %v500 = vpop.f32.mrf.mxu0
    %v501 = vadd.f32 %v297, %v500
    %502 = vdwg.mxu0
    %v503 = vld [vmem:[#allocation11] sm:$0xf]
    %v504 = vld [vmem:[#allocation11 + $0x4] sm:$0xf]
    %v505 = vld [vmem:[#allocation11 + $0x8] sm:$0xf]
    %v506 = vld [vmem:[#allocation11 + $0xc] sm:$0xf]
    %v507 = vld [vmem:[%s8] sm:$0x1]
    %v509 = vlaneseq
    %v510 = vshrl.u32 %v509, 7
    %v511 = vsub.s32 0, %v510
    %v512 = vrot.slane %v507, %v511
    %v516 = vunpack.c.l.b16 %v160
    %v517 = vunpack.c.l.b16 %v161
    %v518 = vpack.c.b16 %v517, %v516
    %v523 = vunpack.c.l.b16 %v503
    %v524 = vunpack.c.l.b16 %v504
    %v525 = vunpack.c.l.b16 %v505
    %v526 = vunpack.c.l.b16 %v506
    %v527 = vpack.c.b16 %v524, %v523
    %v528 = vpack.c.b16 %v526, %v525
    %v532 = vsel %vm203, %v518, 0
    %534 = vmatprep.subr.bf16.mxu0 0
    %535 = vmatpush1.bf16.msra.mxu0 0
    %536 = vmatprep.subr.bf16.mxu0 0
    %537 = vmatpush1.bf16.msra.mxu0 0
    %538 = vmatprep.subr.bf16.mxu0 0
    %539 = vmatpush1.bf16.msra.mxu0 0
    %540 = vmatprep.subr.bf16.mxu0 0
    %541 = vmatpush1.bf16.msra.mxu0 0
    %542 = vmatprep.subr.bf16.mxu0 0
    %543 = vmatpush1.bf16.msra.mxu0 0
    %544 = vmatprep.subr.bf16.mxu0 0
    %545 = vmatpush1.bf16.msra.mxu0 0
    %546 = vmatprep.subr.bf16.mxu0 0
    %547 = vmatpush1.bf16.msra.mxu0 %v528
    %548 = vmatprep.subr.bf16.mxu0 0
    %549 = vmatpush1.bf16.msra.mxu0 %v527
    %550 = vmatprep.subr.bf16.mxu0 0
    %551 = vmatpush2.bf16.msra.mxu0 0
    %552 = vmatprep.subr.bf16.mxu0 0
    %553 = vmatpush2.bf16.msra.mxu0 0
    %554 = vmatprep.subr.bf16.mxu0 0
    %555 = vmatpush2.bf16.msra.mxu0 0
    %556 = vmatprep.subr.bf16.mxu0 0
    %557 = vmatpush2.bf16.msra.mxu0 0
    %558 = vmatprep.subr.bf16.mxu0 0
    %559 = vmatpush2.bf16.msra.mxu0 0
    %560 = vmatprep.subr.bf16.mxu0 0
    %561 = vmatpush2.bf16.msra.mxu0 0
    %562 = vmatprep.subr.bf16.mxu0 0
    %563 = vmatpush2.bf16.msra.mxu0 0
    %564 = vmatprep.subr.bf16.mxu0 0
    %565 = vmatpush2.bf16.msra.mxu0 0
    %566 = vmatprep.mubr.bf16.mxu0 0
    %567 = vmatmul.mubr.bf16.gmra.mxu0 %v532
    %v568 = vpop.f32.mrf.mxu0
    %v569 = vadd.f32 %v512, %v568
    %v570 = vpop.f32.mrf.mxu0
    %v571 = vpop.f32.mrf.mxu0
    %v572 = vadd.f32 %v512, %v571
    %v573 = vpop.f32.mrf.mxu0
    %574 = vdwg.mxu0
    %v575 = vpack.c.bf16 %v499, %v495
    %v576 = vpack.c.bf16 %v501, %v497
    %v577 = vld [vmem:[#allocation10] sm:$0xf]
    %v578 = vld [vmem:[#allocation10 + $0x4] sm:$0xf]
    %v579 = vld [vmem:[#allocation10 + $0x8] sm:$0xf]
    %v580 = vld [vmem:[#allocation10 + $0xc] sm:$0xf]
    %v581 = vld [vmem:[#allocation10 + $0x10] sm:$0xf]
    %v582 = vld [vmem:[#allocation10 + $0x14] sm:$0xf]
    %v583 = vld [vmem:[#allocation10 + $0x18] sm:$0xf]
    %v584 = vld [vmem:[#allocation10 + $0x1c] sm:$0xf]
    %v585 = vld [vmem:[#allocation10 + $0x20] sm:$0xf]
    %v586 = vld [vmem:[#allocation10 + $0x24] sm:$0xf]
    %v587 = vld [vmem:[#allocation10 + $0x28] sm:$0xf]
    %v588 = vld [vmem:[#allocation10 + $0x2c] sm:$0xf]
    %v589 = vld [vmem:[#allocation10 + $0x30] sm:$0xf]
    %v590 = vld [vmem:[#allocation10 + $0x34] sm:$0xf]
    %v591 = vld [vmem:[#allocation10 + $0x38] sm:$0xf]
    %v592 = vld [vmem:[#allocation10 + $0x3c] sm:$0xf]
    %v609 = vunpack.c.l.b16 %v577
    %v610 = vunpack.c.l.b16 %v578
    %v611 = vunpack.c.l.b16 %v579
    %v612 = vunpack.c.l.b16 %v580
    %v613 = vunpack.c.l.b16 %v581
    %v614 = vunpack.c.l.b16 %v582
    %v615 = vunpack.c.l.b16 %v583
    %v616 = vunpack.c.l.b16 %v584
    %v617 = vunpack.c.l.b16 %v585
    %v618 = vunpack.c.l.b16 %v586
    %v619 = vunpack.c.l.b16 %v587
    %v620 = vunpack.c.l.b16 %v588
    %v621 = vunpack.c.l.b16 %v589
    %v622 = vunpack.c.l.b16 %v590
    %v623 = vunpack.c.l.b16 %v591
    %v624 = vunpack.c.l.b16 %v592
    %v625 = vpack.c.b16 %v610, %v609
    %v626 = vpack.c.b16 %v612, %v611
    %v627 = vpack.c.b16 %v614, %v613
    %v628 = vpack.c.b16 %v616, %v615
    %v629 = vpack.c.b16 %v618, %v617
    %v630 = vpack.c.b16 %v620, %v619
    %v631 = vpack.c.b16 %v622, %v621
    %v632 = vpack.c.b16 %v624, %v623
    %641 = vmatprep.subr.bf16.mxu0 0
    %642 = vmatpush1.bf16.msra.mxu0 %v632
    %643 = vmatprep.subr.bf16.mxu0 0
    %644 = vmatpush1.bf16.msra.mxu0 %v631
    %645 = vmatprep.subr.bf16.mxu0 0
    %646 = vmatpush1.bf16.msra.mxu0 %v630
    %647 = vmatprep.subr.bf16.mxu0 0
    %648 = vmatpush1.bf16.msra.mxu0 %v629
    %649 = vmatprep.subr.bf16.mxu0 0
    %650 = vmatpush1.bf16.msra.mxu0 %v628
    %651 = vmatprep.subr.bf16.mxu0 0
    %652 = vmatpush1.bf16.msra.mxu0 %v627
    %653 = vmatprep.subr.bf16.mxu0 0
    %654 = vmatpush1.bf16.msra.mxu0 %v626
    %655 = vmatprep.subr.bf16.mxu0 0
    %656 = vmatpush1.bf16.msra.mxu0 %v625
    %657 = vmatprep.subr.bf16.mxu0 0
    %658 = vmatpush2.bf16.msra.mxu0 0
    %659 = vmatprep.subr.bf16.mxu0 0
    %660 = vmatpush2.bf16.msra.mxu0 0
    %661 = vmatprep.subr.bf16.mxu0 0
    %662 = vmatpush2.bf16.msra.mxu0 0
    %663 = vmatprep.subr.bf16.mxu0 0
    %664 = vmatpush2.bf16.msra.mxu0 0
    %665 = vmatprep.subr.bf16.mxu0 0
    %666 = vmatpush2.bf16.msra.mxu0 0
    %667 = vmatprep.subr.bf16.mxu0 0
    %668 = vmatpush2.bf16.msra.mxu0 0
    %669 = vmatprep.subr.bf16.mxu0 0
    %670 = vmatpush2.bf16.msra.mxu0 0
    %671 = vmatprep.subr.bf16.mxu0 0
    %672 = vmatpush2.bf16.msra.mxu0 0
    %673 = vmatprep.mubr.bf16.mxu0 0
    %674 = vmatmul.mubr.bf16.gmra.mxu0 %v575
    %v675 = vpop.f32.mrf.mxu0
    %v676 = vadd.f32 %v569, %v675
    %v677 = vpop.f32.mrf.mxu0
    %v678 = vpop.f32.mrf.mxu0
    %v679 = vadd.f32 %v572, %v678
    %v680 = vpop.f32.mrf.mxu0
    %681 = vmatprep.mubr.bf16.mxu0 0
    %682 = vmatmul.mubr.bf16.gmra.mxu0 %v576
    %v683 = vpop.f32.mrf.mxu0
    %v684 = vadd.f32 %v569, %v683
    %v685 = vpop.f32.mrf.mxu0
    %v686 = vpop.f32.mrf.mxu0
    %v687 = vadd.f32 %v572, %v686
    %v688 = vpop.f32.mrf.mxu0
    %689 = vdwg.mxu0
    %v690 = vmax.f32 %v676, 0.0
    %v691 = vmax.f32 %v679, 0.0
    %v692 = vmax.f32 %v684, 0.0
    %v693 = vmax.f32 %v687, 0.0
    %v694 = vadd.f32 %v690, %v692
    %v695 = vadd.f32 %v691, %v693
    %v696 = vpack.c.bf16 %v695, %v694
    %v697 = vld [vmem:[#allocation13] sm:$0xf]
    %v698 = vld [vmem:[#allocation13 + $0x4] sm:$0xf]
    %v699 = vld [vmem:[#allocation13 + $0x8] sm:$0xf]
    %v700 = vld [vmem:[#allocation13 + $0xc] sm:$0xf]
    %v701 = vld [vmem:[#allocation13 + $0x10] sm:$0xf]
    %v702 = vld [vmem:[#allocation13 + $0x14] sm:$0xf]
    %v703 = vld [vmem:[#allocation13 + $0x18] sm:$0xf]
    %v704 = vld [vmem:[#allocation13 + $0x1c] sm:$0xf]
    %v705 = vld [vmem:[#allocation13 + $0x20] sm:$0xf]
    %v706 = vld [vmem:[#allocation13 + $0x24] sm:$0xf]
    %v707 = vld [vmem:[#allocation13 + $0x28] sm:$0xf]
    %v708 = vld [vmem:[#allocation13 + $0x2c] sm:$0xf]
    %v709 = vld [vmem:[#allocation13 + $0x30] sm:$0xf]
    %v710 = vld [vmem:[#allocation13 + $0x34] sm:$0xf]
    %v711 = vld [vmem:[#allocation13 + $0x38] sm:$0xf]
    %v712 = vld [vmem:[#allocation13 + $0x3c] sm:$0xf]
    %v713 = vld [vmem:[%s10] sm:$0x1]
    %v715 = vlaneseq
    %v716 = vshrl.u32 %v715, 7
    %v717 = vsub.s32 0, %v716
    %v718 = vrot.slane %v713, %v717
    %v736 = vunpack.c.l.b16 %v697
    %v737 = vunpack.c.l.b16 %v698
    %v738 = vunpack.c.l.b16 %v699
    %v739 = vunpack.c.l.b16 %v700
    %v740 = vunpack.c.l.b16 %v701
    %v741 = vunpack.c.l.b16 %v702
    %v742 = vunpack.c.l.b16 %v703
    %v743 = vunpack.c.l.b16 %v704
    %v744 = vunpack.c.l.b16 %v705
    %v745 = vunpack.c.l.b16 %v706
    %v746 = vunpack.c.l.b16 %v707
    %v747 = vunpack.c.l.b16 %v708
    %v748 = vunpack.c.l.b16 %v709
    %v749 = vunpack.c.l.b16 %v710
    %v750 = vunpack.c.l.b16 %v711
    %v751 = vunpack.c.l.b16 %v712
    %v752 = vpack.c.b16 %v737, %v736
    %v753 = vpack.c.b16 %v739, %v738
    %v754 = vpack.c.b16 %v741, %v740
    %v755 = vpack.c.b16 %v743, %v742
    %v756 = vpack.c.b16 %v745, %v744
    %v757 = vpack.c.b16 %v747, %v746
    %v758 = vpack.c.b16 %v749, %v748
    %v759 = vpack.c.b16 %v751, %v750
    %768 = vmatprep.subr.bf16.mxu0 0
    %769 = vmatpush1.bf16.msra.mxu0 %v759
    %770 = vmatprep.subr.bf16.mxu0 0
    %771 = vmatpush1.bf16.msra.mxu0 %v758
    %772 = vmatprep.subr.bf16.mxu0 0
    %773 = vmatpush1.bf16.msra.mxu0 %v757
    %774 = vmatprep.subr.bf16.mxu0 0
    %775 = vmatpush1.bf16.msra.mxu0 %v756
    %776 = vmatprep.subr.bf16.mxu0 0
    %777 = vmatpush1.bf16.msra.mxu0 %v755
    %778 = vmatprep.subr.bf16.mxu0 0
    %779 = vmatpush1.bf16.msra.mxu0 %v754
    %780 = vmatprep.subr.bf16.mxu0 0
    %781 = vmatpush1.bf16.msra.mxu0 %v753
    %782 = vmatprep.subr.bf16.mxu0 0
    %783 = vmatpush1.bf16.msra.mxu0 %v752
    %784 = vmatprep.subr.bf16.mxu0 0
    %785 = vmatpush2.bf16.msra.mxu0 0
    %786 = vmatprep.subr.bf16.mxu0 0
    %787 = vmatpush2.bf16.msra.mxu0 0
    %788 = vmatprep.subr.bf16.mxu0 0
    %789 = vmatpush2.bf16.msra.mxu0 0
    %790 = vmatprep.subr.bf16.mxu0 0
    %791 = vmatpush2.bf16.msra.mxu0 0
    %792 = vmatprep.subr.bf16.mxu0 0
    %793 = vmatpush2.bf16.msra.mxu0 0
    %794 = vmatprep.subr.bf16.mxu0 0
    %795 = vmatpush2.bf16.msra.mxu0 0
    %796 = vmatprep.subr.bf16.mxu0 0
    %797 = vmatpush2.bf16.msra.mxu0 0
    %798 = vmatprep.subr.bf16.mxu0 0
    %799 = vmatpush2.bf16.msra.mxu0 0
    %800 = vmatprep.mubr.bf16.mxu0 0
    %801 = vmatmul.mubr.bf16.gmra.mxu0 %v696
    %v802 = vpop.f32.mrf.mxu0
    %v803 = vadd.f32 %v718, %v802
    %v804 = vpop.f32.mrf.mxu0
    %v805 = vpop.f32.mrf.mxu0
    %v806 = vadd.f32 %v718, %v805
    %v807 = vpop.f32.mrf.mxu0
    %808 = vdwg.mxu0
    %809 = vst [vmem:[#allocation16] sm:$0xff] %v803
    %810 = vst [vmem:[#allocation16 + $0x8] sm:$0xff] %v806
    %v811 = vpack.c.bf16 %v806, %v803
    %v812 = vld [vmem:[#allocation14] sm:$0xf]
    %v813 = vld [vmem:[#allocation14 + $0x4] sm:$0xf]
    %v814 = vld [vmem:[#allocation14 + $0x8] sm:$0xf]
    %v815 = vld [vmem:[#allocation14 + $0xc] sm:$0xf]
    %v816 = vld [vmem:[#allocation14 + $0x10] sm:$0xf]
    %v817 = vld [vmem:[#allocation14 + $0x14] sm:$0xf]
    %v818 = vld [vmem:[#allocation14 + $0x18] sm:$0xf]
    %v819 = vld [vmem:[#allocation14 + $0x1c] sm:$0xf]
    %v820 = vld [vmem:[#allocation14 + $0x20] sm:$0xf]
    %v821 = vld [vmem:[#allocation14 + $0x24] sm:$0xf]
    %v822 = vld [vmem:[#allocation14 + $0x28] sm:$0xf]
    %v823 = vld [vmem:[#allocation14 + $0x2c] sm:$0xf]
    %v824 = vld [vmem:[#allocation14 + $0x30] sm:$0xf]
    %v825 = vld [vmem:[#allocation14 + $0x34] sm:$0xf]
    %v826 = vld [vmem:[#allocation14 + $0x38] sm:$0xf]
    %v827 = vld [vmem:[#allocation14 + $0x3c] sm:$0xf]
    %v828 = vld [vmem:[%s12] sm:$0x1]
    %v830 = vlaneseq
    %v831 = vshrl.u32 %v830, 7
    %v832 = vsub.s32 0, %v831
    %v833 = vrot.slane %v828, %v832
    %v851 = vunpack.c.l.b16 %v812
    %v852 = vunpack.c.l.b16 %v813
    %v853 = vunpack.c.l.b16 %v814
    %v854 = vunpack.c.l.b16 %v815
    %v855 = vunpack.c.l.b16 %v816
    %v856 = vunpack.c.l.b16 %v817
    %v857 = vunpack.c.l.b16 %v818
    %v858 = vunpack.c.l.b16 %v819
    %v859 = vunpack.c.l.b16 %v820
    %v860 = vunpack.c.l.b16 %v821
    %v861 = vunpack.c.l.b16 %v822
    %v862 = vunpack.c.l.b16 %v823
    %v863 = vunpack.c.l.b16 %v824
    %v864 = vunpack.c.l.b16 %v825
    %v865 = vunpack.c.l.b16 %v826
    %v866 = vunpack.c.l.b16 %v827
    %v867 = vpack.c.b16 %v852, %v851
    %v868 = vpack.c.b16 %v854, %v853
    %v869 = vpack.c.b16 %v856, %v855
    %v870 = vpack.c.b16 %v858, %v857
    %v871 = vpack.c.b16 %v860, %v859
    %v872 = vpack.c.b16 %v862, %v861
    %v873 = vpack.c.b16 %v864, %v863
    %v874 = vpack.c.b16 %v866, %v865
    %883 = vmatprep.subr.bf16.mxu0 0
    %884 = vmatpush1.bf16.msra.mxu0 %v874
    %885 = vmatprep.subr.bf16.mxu0 0
    %886 = vmatpush1.bf16.msra.mxu0 %v873
    %887 = vmatprep.subr.bf16.mxu0 0
    %888 = vmatpush1.bf16.msra.mxu0 %v872
    %889 = vmatprep.subr.bf16.mxu0 0
    %890 = vmatpush1.bf16.msra.mxu0 %v871
    %891 = vmatprep.subr.bf16.mxu0 0
    %892 = vmatpush1.bf16.msra.mxu0 %v870
    %893 = vmatprep.subr.bf16.mxu0 0
    %894 = vmatpush1.bf16.msra.mxu0 %v869
    %895 = vmatprep.subr.bf16.mxu0 0
    %896 = vmatpush1.bf16.msra.mxu0 %v868
    %897 = vmatprep.subr.bf16.mxu0 0
    %898 = vmatpush1.bf16.msra.mxu0 %v867
    %899 = vmatprep.subr.bf16.mxu0 0
    %900 = vmatpush2.bf16.msra.mxu0 0
    %901 = vmatprep.subr.bf16.mxu0 0
    %902 = vmatpush2.bf16.msra.mxu0 0
    %903 = vmatprep.subr.bf16.mxu0 0
    %904 = vmatpush2.bf16.msra.mxu0 0
    %905 = vmatprep.subr.bf16.mxu0 0
    %906 = vmatpush2.bf16.msra.mxu0 0
    %907 = vmatprep.subr.bf16.mxu0 0
    %908 = vmatpush2.bf16.msra.mxu0 0
    %909 = vmatprep.subr.bf16.mxu0 0
    %910 = vmatpush2.bf16.msra.mxu0 0
    %911 = vmatprep.subr.bf16.mxu0 0
    %912 = vmatpush2.bf16.msra.mxu0 0
    %913 = vmatprep.subr.bf16.mxu0 0
    %914 = vmatpush2.bf16.msra.mxu0 0
    %915 = vmatprep.mubr.bf16.mxu0 0
    %916 = vmatmul.mubr.bf16.gmra.mxu0 %v811
    %v917 = vpop.f32.mrf.mxu0
    %v918 = vadd.f32 %v833, %v917
    %v919 = vpop.f32.mrf.mxu0
    %v920 = vpop.f32.mrf.mxu0
    %v921 = vadd.f32 %v833, %v920
    %v922 = vpop.f32.mrf.mxu0
    %923 = vdwg.mxu0
    %924 = vst [vmem:[#allocation17] sm:$0xff] %v918
    %925 = vst [vmem:[#allocation17 + $0x8] sm:$0xff] %v921
    // Predicated region
    $region86: #{tpu_custom_call.1} parent=1 // pred_check
      _
    $region87: #{tpu_custom_call.1} parent=1 // pred_check_branch
      %927 = sbr.rel (0) target = $region89
    $region88: #{tpu_custom_call.1} parent=1 // pred_region
      %s929 = ssub.s32 256, 256
      %930 = vsyncadd [#allocation4], %s929
      %s931 = sshll.u32 [#allocation16], 4
      %s932 = int_to_ptr.vmem [resolvable:$true] %s931
      %937 = dma.vmem_to_hbm [thread:$0]  %s932, 256, %s13, [#allocation4], 128, 128, 8
    $region89: #{tpu_custom_call.1} parent=1 // pred_fallthru
      _
    // Predicated region
    $region90: #{tpu_custom_call.1} parent=1 // pred_check
      _
    $region91: #{tpu_custom_call.1} parent=1 // pred_check_branch
      %939 = sbr.rel (0) target = $region93
    $region92: #{tpu_custom_call.1} parent=1 // pred_region
      %s941 = ssub.s32 256, 256
      %942 = vsyncadd [#allocation18], %s941
      %s943 = sshll.u32 [#allocation17], 4
      %s944 = int_to_ptr.vmem [resolvable:$true] %s943
      %949 = dma.vmem_to_hbm [thread:$0]  %s944, 256, %s14, [#allocation18], 128, 128, 8
    $region93: #{tpu_custom_call.1} parent=1 // pred_fallthru
      _
    // Predicated region
    $region94: #{tpu_custom_call.1} parent=1 // pred_check
      _
    $region95: #{tpu_custom_call.1} parent=1 // pred_check_branch
      %951 = sbr.rel (0) target = $region97
    $region96: #{tpu_custom_call.1} parent=1 // pred_region
      %952 = dma.done [#allocation4], 256
    $region97: #{tpu_custom_call.1} parent=1 // pred_fallthru
      _
    // Predicated region
    $region98: #{tpu_custom_call.1} parent=1 // pred_check
      _
    $region99: #{tpu_custom_call.1} parent=1 // pred_check_branch
      %954 = sbr.rel (0) target = $region101
    $region100: #{tpu_custom_call.1} parent=1 // pred_region
      %955 = dma.done [#allocation18], 256
    $region101: #{tpu_custom_call.1} parent=1 // pred_fallthru
      _
    %956 = vsyncpa [#allocation3], 1
    %957 = vsyncpa [#allocation6], 1
    %958 = vsyncpa [#allocation9], 1
    %959 = vsyncpa [#allocation12], 1
    %960 = vsyncpa [#allocation15], 1
    %961 = vsyncpa [#allocation4], 1
    %962 = vsyncpa [#allocation18], 1

</llo_original>
